<compile_context>
chip_gen: v7x
topology: tpu7x:2x2x1
jax: 0.10.0
libtpu: 0.0.40
codegen_flags: <defaults>
</compile_context>

<pallas_src>
import math
import functools

import jax
import jax.numpy as jnp
from jax.experimental import pallas as pl
from jax.experimental.pallas import tpu as pltpu


_LOGITS_PAD = 128   # lane-dense width for the padded classifier output


# ----------------------------- kernel helpers ------------------------------

def _layernorm(x, g, b, eps=1e-5):
    mu = jnp.mean(x, axis=-1, keepdims=True)
    var = jnp.mean((x - mu) ** 2, axis=-1, keepdims=True)
    return (x - mu) * jax.lax.rsqrt(var + eps) * g + b


def _erf(x):
    # Abramowitz & Stegun 7.1.26 polynomial erf; |error| < 1.5e-7, i.e.
    # float32-exact for the erf-based (torch default) GELU below.
    sign = jnp.where(x >= 0.0, 1.0, -1.0)
    ax = jnp.abs(x)
    t = 1.0 / (1.0 + 0.3275911 * ax)
    poly = ((((1.061405429 * t - 1.453152027) * t + 1.421413741) * t
             - 0.284496736) * t + 0.254829592) * t
    return sign * (1.0 - poly * jnp.exp(-ax * ax))


def _gelu_exact(x):
    return 0.5 * x * (1.0 + _erf(x * (1.0 / math.sqrt(2.0))))


# --------------------------------- kernel ----------------------------------

def video_chapter_kernel(
    # per-block inputs
    pos_ref, x_ref,
    # position-encoding MLP
    wpe1_loc, wpe1_glob, bpe1, gpe1_g, gpe1_b,
    wpe2, bpe2, gpe2_g, gpe2_b,
    # pre-attention layernorm
    aln_g, aln_b,
    # attention projections
    wq, bq, wk, bk, wv, bv, wo, bo,
    # window positional bias [S, heads], head-membership masks
    pbias, hmask, hmask_t,
    # FFN layernorm + FFN
    fln_g, fln_b,
    wf1, bf1, wf2, bf2,
    # classifier (last layer lane-padded to _LOGITS_PAD columns)
    cln_g, cln_b,
    wc1, bc1, wc2, bc2, wc3, bc3,
    # outputs
    logits_ref,
    *, inv_scale):

    Bt, S, H = x_ref.shape
    mid = S // 2
    BS = Bt * S
    nh = hmask.shape[1]

    x3 = x_ref[...]                                   # [Bt, S, H]
    pos3 = pos_ref[...]                               # [Bt, S, 2]

    x2 = x3.reshape(BS, H)
    loc = pos3[:, :, 0:1].reshape(BS, 1)
    glob = pos3[:, :, 1:2].reshape(BS, 1)

    # ---- position encoding: Linear(2,H/2) -> LN -> tanh -> Linear(H/2,H) -> LN
    t = loc * wpe1_loc[...] + glob * wpe1_glob[...] + bpe1[...]      # [BS, H/2]
    t = _layernorm(t, gpe1_g[...], gpe1_b[...])
    t = jnp.tanh(t)
    t = jnp.dot(t, wpe2[...], preferred_element_type=jnp.float32) + bpe2[...]
    pe2 = _layernorm(t, gpe2_g[...], gpe2_b[...])                    # [BS, H]

    # ---- block: residual from raw input mid row, pre-attention LN ----
    xn2 = _layernorm(x2, aln_g[...], aln_b[...])                     # [BS, H]
    h2 = xn2 + pe2                                                   # [BS, H]

    x_mid = x3[:, mid, :]                                            # [Bt, H]
    h_mid = h2.reshape(Bt, S, H)[:, mid, :]                          # [Bt, H]

    # ---- windowed single-query multi-head attention (batched, MXU-heavy) ----
    q = jnp.dot(h_mid, wq[...], preferred_element_type=jnp.float32) + bq[...]
    q = q * inv_scale                                                # fold 1/scale
    k2 = jnp.dot(h2, wk[...], preferred_element_type=jnp.float32) + bk[...]
    v2 = jnp.dot(h2, wv[...], preferred_element_type=jnp.float32) + bv[...]

    k3 = k2.reshape(Bt, S, H)
    v3 = v2.reshape(Bt, S, H)

    # per-head score[b, s, h] = sum over head-h channels of q[b]*k[b, s]
    prod = k3 * q[:, None, :]                                        # [Bt, S, H]
    scores = jnp.dot(prod.reshape(BS, H), hmask[...],
                     preferred_element_type=jnp.float32).reshape(Bt, S, nh)
    bias = jnp.clip(pbias[...], -10.0, 10.0)[None, :, :]             # [1, S, nh]
    scores = jnp.clip(scores + bias, -10.0, 10.0)

    # softmax over the key / window dimension (axis 1)
    m = jnp.max(scores, axis=1, keepdims=True)
    e = jnp.exp(scores - m)
    denom = jnp.sum(e, axis=1, keepdims=True)
    p = e * pl.reciprocal(denom, approx=True)                        # [Bt, S, nh]

    # expand per-head probs back to [*, H] channel layout via MXU
    pfull = jnp.dot(p.reshape(BS, nh), hmask_t[...],
                    preferred_element_type=jnp.float32).reshape(Bt, S, H)
    context = jnp.sum(pfull * v3, axis=1)                            # [Bt, H]

    attn = jnp.dot(context, wo[...], preferred_element_type=jnp.float32) + bo[...]
    attn = attn + x_mid                                              # residual

    # ---- FFN sub-block ----
    nrm = _layernorm(attn, fln_g[...], fln_b[...])
    f = jnp.dot(nrm, wf1[...], preferred_element_type=jnp.float32) + bf1[...]
    f = _gelu_exact(f)
    f = jnp.dot(f, wf2[...], preferred_element_type=jnp.float32) + bf2[...]
    out = f + attn                                                   # [Bt, H]

    # ---- classifier head (output lane-padded to _LOGITS_PAD columns) ----
    c = _layernorm(out, cln_g[...], cln_b[...])
    c = jnp.maximum(
        jnp.dot(c, wc1[...], preferred_element_type=jnp.float32) + bc1[...], 0.0)
    c = jnp.maximum(
        jnp.dot(c, wc2[...], preferred_element_type=jnp.float32) + bc2[...], 0.0)
    logits = jnp.dot(c, wc3[...],
                     preferred_element_type=jnp.float32) + bc3[...]  # [Bt, 128]

    logits_ref[...] = logits


# ------------------------------ host wrapper --------------------------------

PARAM_ORDER = [
    "wpe1_loc", "wpe1_glob", "bpe1", "gpe1_g", "gpe1_b",
    "wpe2", "bpe2", "gpe2_g", "gpe2_b",
    "aln_g", "aln_b",
    "wq", "bq", "wk", "bk", "wv", "bv", "wo", "bo",
    "pbias", "hmask", "hmask_t",
    "fln_g", "fln_b",
    "wf1", "bf1", "wf2", "bf2",
    "cln_g", "cln_b",
    "wc1", "bc1", "wc2", "bc2", "wc3", "bc3",
]


def _pick_block_batch(B, target):
    """Largest divisor of B that is <= target (keeps the grid exact)."""
    bt = min(B, target)
    while B % bt:
        bt -= 1
    return bt


def video_chapter_classifier(fusion_emb, pos_info, params, *, num_heads,
                             block_batch=128):
    B, S, H = fusion_emb.shape
    H2 = H // 2
    head_dim = H // num_heads
    inv_scale = 1.0 / (math.sqrt(head_dim) + 1e-6)

    bt = _pick_block_batch(B, block_batch)
    nb = B // bt

    # lane-pad the final classifier layer so the kernel's output store is a
    # dense 128-lane slab (unmasked vst) instead of per-row 2-lane stores.
    wc3 = params["wc3"]
    bc3 = params["bc3"]
    ncls = wc3.shape[1]
    wc3p = jnp.zeros((wc3.shape[0], _LOGITS_PAD), jnp.float32).at[:, :ncls].set(wc3)
    bc3p = jnp.zeros((1, _LOGITS_PAD), jnp.float32).at[:, :ncls].set(bc3)
    prepared = dict(params)
    prepared["wc3"] = wc3p
    prepared["bc3"] = bc3p
    weights = [prepared[k] for k in PARAM_ORDER]

    in_specs = [
        pl.BlockSpec((bt, S, 2), lambda i: (i, 0, 0)),   # pos_info
        pl.BlockSpec((bt, S, H), lambda i: (i, 0, 0)),   # fusion_emb
    ]
    for w in weights:
        in_specs.append(
            pl.BlockSpec(w.shape, lambda i, nd=w.ndim: (0,) * nd))

    out_specs = pl.BlockSpec((None, bt, _LOGITS_PAD), lambda i: (i, 0, 0))
    out_shape = jax.ShapeDtypeStruct((nb, bt, _LOGITS_PAD), jnp.float32)

    # rough cost hint for the XLA scheduler around the custom call
    flops_pb = S * (2 * (2 * H2 + H2 * H)                 # position MLP
                    + 4 * H * H                           # k, v projections
                    + 4 * H * num_heads)                  # score + prob expand
    flops_pb += 4 * H * H                                  # q + out projections
    flops_pb += 4 * H * 4 * H                              # FFN
    flops_pb += 2 * (H * H + H * H2 + H2 * _LOGITS_PAD)    # classifier
    transcend = B * (S * H2 + S * num_heads + 4 * H + 8 * S)
    weight_bytes = sum(int(w.size) * 4 for w in weights)
    bytes_accessed = weight_bytes + B * S * (H + 2) * 4 + B * _LOGITS_PAD * 4
    cost = pl.CostEstimate(flops=int(B * flops_pb),
                           transcendentals=int(transcend),
                           bytes_accessed=int(bytes_accessed))

    kernel = functools.partial(video_chapter_kernel, inv_scale=inv_scale)

    fn = pl.pallas_call(
        kernel,
        out_shape=out_shape,
        grid_spec=pltpu.PrefetchScalarGridSpec(
            num_scalar_prefetch=0,
            grid=(nb,),
            in_specs=in_specs,
            out_specs=out_specs,
        ),
        compiler_params=pltpu.CompilerParams(
            dimension_semantics=("parallel",)),   # batch blocks are independent
        cost_estimate=cost,
    )

    padded = fn(pos_info, fusion_emb, *weights)            # [nb, bt, 128]
    logits = padded.reshape(B, _LOGITS_PAD)[:, :ncls]       # [B, 2]
    probs = jax.nn.softmax(logits, axis=-1)                 # 2-class softmax: free in XLA
    return logits, probs


def compute_position_info(target_clip_idx, total_num_clips, window_size):
    """Glue: replicates get_clip_positions / per-batch window index math."""
    mid = window_size // 2
    local = (jnp.arange(window_size, dtype=jnp.float32) - mid) / (mid + 1e-6)

    def one(t_idx, n_clips):
        n = n_clips.astype(jnp.float32)
        win = (jnp.arange(window_size, dtype=jnp.float32)
               + (t_idx - mid).astype(jnp.float32))
        win = jnp.clip(win, 0.0, n - 1.0)
        glob = jnp.log(win + 1.0) / jnp.log(n + 1.0)
        return jnp.stack([local, glob], axis=-1)     # [S, 2]

    return jax.vmap(one)(target_clip_idx, total_num_clips)


def init_params(key, H, num_heads, window_size):
    """Deterministic synthetic parameters (shapes follow the torch module)."""
    H2 = H // 2
    dh = H // num_heads
    ks = jax.random.split(key, 12)

    def kaiming(k, fan_in, shape):          # weight stored as [in, out]
        return (jax.random.normal(k, shape, jnp.float32)
                * math.sqrt(2.0 / fan_in))

    def xavier_scaled(k, shape, gain):
        fan_in, fan_out = shape
        std = gain * math.sqrt(2.0 / (fan_in + fan_out))
        return jax.random.normal(k, shape, jnp.float32) * std

    scale = 1.0 / math.sqrt(dh)
    z = lambda s: jnp.zeros(s, jnp.float32)
    o = lambda s: jnp.ones(s, jnp.float32)

    p = {}
    wpe1 = kaiming(ks[0], 2, (2, H2))
    p["wpe1_loc"] = wpe1[0:1, :]
    p["wpe1_glob"] = wpe1[1:2, :]
    p["bpe1"] = z((1, H2)); p["gpe1_g"] = o((1, H2)); p["gpe1_b"] = z((1, H2))
    p["wpe2"] = kaiming(ks[1], H2, (H2, H))
    p["bpe2"] = z((1, H)); p["gpe2_g"] = o((1, H)); p["gpe2_b"] = z((1, H))

    p["aln_g"] = o((1, H)); p["aln_b"] = z((1, H))

    p["wq"] = xavier_scaled(ks[2], (H, H), scale); p["bq"] = z((1, H))
    p["wk"] = xavier_scaled(ks[3], (H, H), scale); p["bk"] = z((1, H))
    p["wv"] = xavier_scaled(ks[4], (H, H), scale); p["bv"] = z((1, H))
    p["wo"] = xavier_scaled(ks[5], (H, H), scale); p["bo"] = z((1, H))

    # window_pos_bias: torch shape [1, heads, 1, S] -> stored as [S, heads]
    wpb = 0.02 * jax.random.normal(ks[6], (1, num_heads, 1, window_size),
                                   jnp.float32)
    p["pbias"] = wpb.reshape(num_heads, window_size).T

    cols = jnp.arange(H) // dh
    p["hmask"] = (cols[:, None] == jnp.arange(num_heads)[None, :]
                  ).astype(jnp.float32)                 # [H, heads]
    p["hmask_t"] = p["hmask"].T                         # [heads, H]

    p["fln_g"] = o((1, H)); p["fln_b"] = z((1, H))
    p["wf1"] = kaiming(ks[7], H, (H, 4 * H)); p["bf1"] = z((1, 4 * H))
    p["wf2"] = kaiming(ks[8], 4 * H, (4 * H, H)); p["bf2"] = z((1, H))

    p["cln_g"] = o((1, H)); p["cln_b"] = z((1, H))
    p["wc1"] = kaiming(ks[9], H, (H, H)); p["bc1"] = z((1, H))
    p["wc2"] = kaiming(ks[10], H, (H, H2)); p["bc2"] = z((1, H2))
    p["wc3"] = kaiming(ks[11], H2, (H2, 2)); p["bc3"] = z((1, 2))
    return p


if __name__ == "__main__":
    B, S, H, HEADS = 2, 8, 32, 4   # window_size = S = 8, hidden = 32

    key = jax.random.PRNGKey(0)
    k_x, k_p = jax.random.split(key)

    fusion_emb = jax.random.normal(k_x, (B, S, H), jnp.float32)
    clip_info = {
        "target_clip_idx": jnp.array([5, 12], dtype=jnp.int32),
        "total_num_clips": jnp.array([20, 30], dtype=jnp.int32),
    }

    params = init_params(k_p, H, HEADS, S)
    pos_info = compute_position_info(clip_info["target_clip_idx"],
                                     clip_info["total_num_clips"], S)

    logits, probs = video_chapter_classifier(fusion_emb, pos_info, params,
                                             num_heads=HEADS)
    jax.block_until_ready((logits, probs))

    assert logits.shape == (B, 2) and probs.shape == (B, 2)
    assert bool(jnp.all(jnp.isfinite(logits))) and bool(jnp.all(jnp.isfinite(probs)))
    print("KERNEL_OK")
</pallas_src>

<mosaic_0001>
module attributes {stable_mosaic.version = 11 : i64} {
  func.func @video_chapter_kernel(%arg0: i32, %arg1: memref<2x8x2xf32, #tpu.memory_space<vmem>>, %arg2: memref<2x8x32xf32, #tpu.memory_space<vmem>>, %arg3: memref<1x16xf32, #tpu.memory_space<vmem>>, %arg4: memref<1x16xf32, #tpu.memory_space<vmem>>, %arg5: memref<1x16xf32, #tpu.memory_space<vmem>>, %arg6: memref<1x16xf32, #tpu.memory_space<vmem>>, %arg7: memref<1x16xf32, #tpu.memory_space<vmem>>, %arg8: memref<16x32xf32, #tpu.memory_space<vmem>>, %arg9: memref<1x32xf32, #tpu.memory_space<vmem>>, %arg10: memref<1x32xf32, #tpu.memory_space<vmem>>, %arg11: memref<1x32xf32, #tpu.memory_space<vmem>>, %arg12: memref<1x32xf32, #tpu.memory_space<vmem>>, %arg13: memref<1x32xf32, #tpu.memory_space<vmem>>, %arg14: memref<32x32xf32, #tpu.memory_space<vmem>>, %arg15: memref<1x32xf32, #tpu.memory_space<vmem>>, %arg16: memref<32x32xf32, #tpu.memory_space<vmem>>, %arg17: memref<1x32xf32, #tpu.memory_space<vmem>>, %arg18: memref<32x32xf32, #tpu.memory_space<vmem>>, %arg19: memref<1x32xf32, #tpu.memory_space<vmem>>, %arg20: memref<32x32xf32, #tpu.memory_space<vmem>>, %arg21: memref<1x32xf32, #tpu.memory_space<vmem>>, %arg22: memref<8x4xf32, #tpu.memory_space<vmem>>, %arg23: memref<32x4xf32, #tpu.memory_space<vmem>>, %arg24: memref<4x32xf32, #tpu.memory_space<vmem>>, %arg25: memref<1x32xf32, #tpu.memory_space<vmem>>, %arg26: memref<1x32xf32, #tpu.memory_space<vmem>>, %arg27: memref<32x128xf32, #tpu.memory_space<vmem>>, %arg28: memref<1x128xf32, #tpu.memory_space<vmem>>, %arg29: memref<128x32xf32, #tpu.memory_space<vmem>>, %arg30: memref<1x32xf32, #tpu.memory_space<vmem>>, %arg31: memref<1x32xf32, #tpu.memory_space<vmem>>, %arg32: memref<1x32xf32, #tpu.memory_space<vmem>>, %arg33: memref<32x32xf32, #tpu.memory_space<vmem>>, %arg34: memref<1x32xf32, #tpu.memory_space<vmem>>, %arg35: memref<32x16xf32, #tpu.memory_space<vmem>>, %arg36: memref<1x16xf32, #tpu.memory_space<vmem>>, %arg37: memref<16x128xf32, #tpu.memory_space<vmem>>, %arg38: memref<1x128xf32, #tpu.memory_space<vmem>>, %arg39: memref<1x2x128xf32, #tpu.memory_space<vmem>>) attributes {dimension_semantics = [#tpu.dimension_semantics<parallel>], iteration_bounds = array<i64: 1>, scalar_prefetch = 0 : i64, scratch_operands = 0 : i64, tpu.core_type = #tpu.core_type<tc>, window_params = [{transform_indices = @transform_0, window_bounds = array<i64: 2, 8, 2>}, {transform_indices = @transform_1, window_bounds = array<i64: 2, 8, 32>}, {pipeline_mode = #tpu.pipeline_mode<synchronous>, transform_indices = @transform_2, window_bounds = array<i64: 1, 16>}, {pipeline_mode = #tpu.pipeline_mode<synchronous>, transform_indices = @transform_3, window_bounds = array<i64: 1, 16>}, {pipeline_mode = #tpu.pipeline_mode<synchronous>, transform_indices = @transform_4, window_bounds = array<i64: 1, 16>}, {pipeline_mode = #tpu.pipeline_mode<synchronous>, transform_indices = @transform_5, window_bounds = array<i64: 1, 16>}, {pipeline_mode = #tpu.pipeline_mode<synchronous>, transform_indices = @transform_6, window_bounds = array<i64: 1, 16>}, {pipeline_mode = #tpu.pipeline_mode<synchronous>, transform_indices = @transform_7, window_bounds = array<i64: 16, 32>}, {pipeline_mode = #tpu.pipeline_mode<synchronous>, transform_indices = @transform_8, window_bounds = array<i64: 1, 32>}, {pipeline_mode = #tpu.pipeline_mode<synchronous>, transform_indices = @transform_9, window_bounds = array<i64: 1, 32>}, {pipeline_mode = #tpu.pipeline_mode<synchronous>, transform_indices = @transform_10, window_bounds = array<i64: 1, 32>}, {pipeline_mode = #tpu.pipeline_mode<synchronous>, transform_indices = @transform_11, window_bounds = array<i64: 1, 32>}, {pipeline_mode = #tpu.pipeline_mode<synchronous>, transform_indices = @transform_12, window_bounds = array<i64: 1, 32>}, {pipeline_mode = #tpu.pipeline_mode<synchronous>, transform_indices = @transform_13, window_bounds = array<i64: 32, 32>}, {pipeline_mode = #tpu.pipeline_mode<synchronous>, transform_indices = @transform_14, window_bounds = array<i64: 1, 32>}, {pipeline_mode = #tpu.pipeline_mode<synchronous>, transform_indices = @transform_15, window_bounds = array<i64: 32, 32>}, {pipeline_mode = #tpu.pipeline_mode<synchronous>, transform_indices = @transform_16, window_bounds = array<i64: 1, 32>}, {pipeline_mode = #tpu.pipeline_mode<synchronous>, transform_indices = @transform_17, window_bounds = array<i64: 32, 32>}, {pipeline_mode = #tpu.pipeline_mode<synchronous>, transform_indices = @transform_18, window_bounds = array<i64: 1, 32>}, {pipeline_mode = #tpu.pipeline_mode<synchronous>, transform_indices = @transform_19, window_bounds = array<i64: 32, 32>}, {pipeline_mode = #tpu.pipeline_mode<synchronous>, transform_indices = @transform_20, window_bounds = array<i64: 1, 32>}, {pipeline_mode = #tpu.pipeline_mode<synchronous>, transform_indices = @transform_21, window_bounds = array<i64: 8, 4>}, {pipeline_mode = #tpu.pipeline_mode<synchronous>, transform_indices = @transform_22, window_bounds = array<i64: 32, 4>}, {pipeline_mode = #tpu.pipeline_mode<synchronous>, transform_indices = @transform_23, window_bounds = array<i64: 4, 32>}, {pipeline_mode = #tpu.pipeline_mode<synchronous>, transform_indices = @transform_24, window_bounds = array<i64: 1, 32>}, {pipeline_mode = #tpu.pipeline_mode<synchronous>, transform_indices = @transform_25, window_bounds = array<i64: 1, 32>}, {pipeline_mode = #tpu.pipeline_mode<synchronous>, transform_indices = @transform_26, window_bounds = array<i64: 32, 128>}, {pipeline_mode = #tpu.pipeline_mode<synchronous>, transform_indices = @transform_27, window_bounds = array<i64: 1, 128>}, {pipeline_mode = #tpu.pipeline_mode<synchronous>, transform_indices = @transform_28, window_bounds = array<i64: 128, 32>}, {pipeline_mode = #tpu.pipeline_mode<synchronous>, transform_indices = @transform_29, window_bounds = array<i64: 1, 32>}, {pipeline_mode = #tpu.pipeline_mode<synchronous>, transform_indices = @transform_30, window_bounds = array<i64: 1, 32>}, {pipeline_mode = #tpu.pipeline_mode<synchronous>, transform_indices = @transform_31, window_bounds = array<i64: 1, 32>}, {pipeline_mode = #tpu.pipeline_mode<synchronous>, transform_indices = @transform_32, window_bounds = array<i64: 32, 32>}, {pipeline_mode = #tpu.pipeline_mode<synchronous>, transform_indices = @transform_33, window_bounds = array<i64: 1, 32>}, {pipeline_mode = #tpu.pipeline_mode<synchronous>, transform_indices = @transform_34, window_bounds = array<i64: 32, 16>}, {pipeline_mode = #tpu.pipeline_mode<synchronous>, transform_indices = @transform_35, window_bounds = array<i64: 1, 16>}, {pipeline_mode = #tpu.pipeline_mode<synchronous>, transform_indices = @transform_36, window_bounds = array<i64: 16, 128>}, {pipeline_mode = #tpu.pipeline_mode<synchronous>, transform_indices = @transform_37, window_bounds = array<i64: 1, 128>}, {transform_indices = @transform_38, window_bounds = array<i64: 1, 2, 128>}]} {
    %c0 = arith.constant 0 : index
    %c0_0 = arith.constant 0 : index
    %c0_1 = arith.constant 0 : index
    %0 = vector.load %arg2[%c0, %c0_0, %c0_1] : memref<2x8x32xf32, #tpu.memory_space<vmem>>, vector<2x8x32xf32>
    %c0_2 = arith.constant 0 : index
    %c0_3 = arith.constant 0 : index
    %c0_4 = arith.constant 0 : index
    %1 = vector.load %arg1[%c0_2, %c0_3, %c0_4] : memref<2x8x2xf32, #tpu.memory_space<vmem>>, vector<2x8x2xf32>
    %2 = vector.shape_cast %0 : vector<2x8x32xf32> to vector<16x32xf32>
    %3 = vector.extract_strided_slice %1 {offsets = [0, 0, 0], sizes = [2, 8, 1], strides = [1, 1, 1]} : vector<2x8x2xf32> to vector<2x8x1xf32>
    %4 = vector.shape_cast %3 : vector<2x8x1xf32> to vector<16x1xf32>
    %5 = vector.extract_strided_slice %1 {offsets = [0, 0, 1], sizes = [2, 8, 1], strides = [1, 1, 1]} : vector<2x8x2xf32> to vector<2x8x1xf32>
    %6 = vector.shape_cast %5 : vector<2x8x1xf32> to vector<16x1xf32>
    %c0_5 = arith.constant 0 : index
    %c0_6 = arith.constant 0 : index
    %7 = vector.load %arg3[%c0_5, %c0_6] : memref<1x16xf32, #tpu.memory_space<vmem>>, vector<1x16xf32>
    %8 = vector.broadcast %4 : vector<16x1xf32> to vector<16x16xf32>
    %9 = vector.broadcast %7 : vector<1x16xf32> to vector<16x16xf32>
    %10 = arith.mulf %8, %9 : vector<16x16xf32>
    %c0_7 = arith.constant 0 : index
    %c0_8 = arith.constant 0 : index
    %11 = vector.load %arg4[%c0_7, %c0_8] : memref<1x16xf32, #tpu.memory_space<vmem>>, vector<1x16xf32>
    %12 = vector.broadcast %6 : vector<16x1xf32> to vector<16x16xf32>
    %13 = vector.broadcast %11 : vector<1x16xf32> to vector<16x16xf32>
    %14 = arith.mulf %12, %13 : vector<16x16xf32>
    %15 = arith.addf %10, %14 : vector<16x16xf32>
    %c0_9 = arith.constant 0 : index
    %c0_10 = arith.constant 0 : index
    %16 = vector.load %arg5[%c0_9, %c0_10] : memref<1x16xf32, #tpu.memory_space<vmem>>, vector<1x16xf32>
    %17 = vector.broadcast %16 : vector<1x16xf32> to vector<16x16xf32>
    %18 = arith.addf %15, %17 : vector<16x16xf32>
    %c0_11 = arith.constant 0 : index
    %c0_12 = arith.constant 0 : index
    %19 = vector.load %arg6[%c0_11, %c0_12] : memref<1x16xf32, #tpu.memory_space<vmem>>, vector<1x16xf32>
    %c0_13 = arith.constant 0 : index
    %c0_14 = arith.constant 0 : index
    %20 = vector.load %arg7[%c0_13, %c0_14] : memref<1x16xf32, #tpu.memory_space<vmem>>, vector<1x16xf32>
    %cst = arith.constant dense<0.000000e+00> : vector<16xf32>
    %21 = vector.multi_reduction <add>, %18, %cst [1] : vector<16x16xf32> to vector<16xf32>
    %22 = vector.shape_cast %21 : vector<16xf32> to vector<16x1xf32>
    %cst_15 = arith.constant 1.600000e+01 : f32
    %23 = vector.broadcast %cst_15 : f32 to vector<16x1xf32>
    %24 = arith.divf %22, %23 : vector<16x1xf32>
    %25 = vector.broadcast %24 : vector<16x1xf32> to vector<16x16xf32>
    %26 = arith.subf %18, %25 : vector<16x16xf32>
    %27 = arith.mulf %26, %26 : vector<16x16xf32>
    %cst_16 = arith.constant dense<0.000000e+00> : vector<16xf32>
    %28 = vector.multi_reduction <add>, %27, %cst_16 [1] : vector<16x16xf32> to vector<16xf32>
    %29 = vector.shape_cast %28 : vector<16xf32> to vector<16x1xf32>
    %cst_17 = arith.constant 1.600000e+01 : f32
    %30 = vector.broadcast %cst_17 : f32 to vector<16x1xf32>
    %31 = arith.divf %29, %30 : vector<16x1xf32>
    %32 = vector.broadcast %24 : vector<16x1xf32> to vector<16x16xf32>
    %33 = arith.subf %18, %32 : vector<16x16xf32>
    %cst_18 = arith.constant 9.99999974E-6 : f32
    %34 = vector.broadcast %cst_18 : f32 to vector<16x1xf32>
    %35 = arith.addf %31, %34 : vector<16x1xf32>
    %36 = math.rsqrt %35 : vector<16x1xf32>
    %37 = vector.broadcast %36 : vector<16x1xf32> to vector<16x16xf32>
    %38 = arith.mulf %33, %37 : vector<16x16xf32>
    %39 = vector.broadcast %19 : vector<1x16xf32> to vector<16x16xf32>
    %40 = arith.mulf %38, %39 : vector<16x16xf32>
    %41 = vector.broadcast %20 : vector<1x16xf32> to vector<16x16xf32>
    %42 = arith.addf %40, %41 : vector<16x16xf32>
    %43 = math.tanh %42 : vector<16x16xf32>
    %c0_19 = arith.constant 0 : index
    %c0_20 = arith.constant 0 : index
    %44 = vector.load %arg8[%c0_19, %c0_20] : memref<16x32xf32, #tpu.memory_space<vmem>>, vector<16x32xf32>
    %cst_21 = arith.constant dense<0.000000e+00> : vector<16x32xf32>
    %45 = tpu.matmul %43, %44, %cst_21 {dimension_numbers = #tpu.dot_dimension_numbers<[1], [0], [0], [1], [0, 0, 1, 1], [], []>} : vector<16x16xf32>, vector<16x32xf32>, vector<16x32xf32> -> vector<16x32xf32>
    %c0_22 = arith.constant 0 : index
    %c0_23 = arith.constant 0 : index
    %46 = vector.load %arg9[%c0_22, %c0_23] : memref<1x32xf32, #tpu.memory_space<vmem>>, vector<1x32xf32>
    %47 = vector.broadcast %46 : vector<1x32xf32> to vector<16x32xf32>
    %48 = arith.addf %45, %47 : vector<16x32xf32>
    %c0_24 = arith.constant 0 : index
    %c0_25 = arith.constant 0 : index
    %49 = vector.load %arg10[%c0_24, %c0_25] : memref<1x32xf32, #tpu.memory_space<vmem>>, vector<1x32xf32>
    %c0_26 = arith.constant 0 : index
    %c0_27 = arith.constant 0 : index
    %50 = vector.load %arg11[%c0_26, %c0_27] : memref<1x32xf32, #tpu.memory_space<vmem>>, vector<1x32xf32>
    %cst_28 = arith.constant dense<0.000000e+00> : vector<16xf32>
    %51 = vector.multi_reduction <add>, %48, %cst_28 [1] : vector<16x32xf32> to vector<16xf32>
    %52 = vector.shape_cast %51 : vector<16xf32> to vector<16x1xf32>
    %cst_29 = arith.constant 3.200000e+01 : f32
    %53 = vector.broadcast %cst_29 : f32 to vector<16x1xf32>
    %54 = arith.divf %52, %53 : vector<16x1xf32>
    %55 = vector.broadcast %54 : vector<16x1xf32> to vector<16x32xf32>
    %56 = arith.subf %48, %55 : vector<16x32xf32>
    %57 = arith.mulf %56, %56 : vector<16x32xf32>
    %cst_30 = arith.constant dense<0.000000e+00> : vector<16xf32>
    %58 = vector.multi_reduction <add>, %57, %cst_30 [1] : vector<16x32xf32> to vector<16xf32>
    %59 = vector.shape_cast %58 : vector<16xf32> to vector<16x1xf32>
    %cst_31 = arith.constant 3.200000e+01 : f32
    %60 = vector.broadcast %cst_31 : f32 to vector<16x1xf32>
    %61 = arith.divf %59, %60 : vector<16x1xf32>
    %62 = vector.broadcast %54 : vector<16x1xf32> to vector<16x32xf32>
    %63 = arith.subf %48, %62 : vector<16x32xf32>
    %cst_32 = arith.constant 9.99999974E-6 : f32
    %64 = vector.broadcast %cst_32 : f32 to vector<16x1xf32>
    %65 = arith.addf %61, %64 : vector<16x1xf32>
    %66 = math.rsqrt %65 : vector<16x1xf32>
    %67 = vector.broadcast %66 : vector<16x1xf32> to vector<16x32xf32>
    %68 = arith.mulf %63, %67 : vector<16x32xf32>
    %69 = vector.broadcast %49 : vector<1x32xf32> to vector<16x32xf32>
    %70 = arith.mulf %68, %69 : vector<16x32xf32>
    %71 = vector.broadcast %50 : vector<1x32xf32> to vector<16x32xf32>
    %72 = arith.addf %70, %71 : vector<16x32xf32>
    %c0_33 = arith.constant 0 : index
    %c0_34 = arith.constant 0 : index
    %73 = vector.load %arg12[%c0_33, %c0_34] : memref<1x32xf32, #tpu.memory_space<vmem>>, vector<1x32xf32>
    %c0_35 = arith.constant 0 : index
    %c0_36 = arith.constant 0 : index
    %74 = vector.load %arg13[%c0_35, %c0_36] : memref<1x32xf32, #tpu.memory_space<vmem>>, vector<1x32xf32>
    %cst_37 = arith.constant dense<0.000000e+00> : vector<16xf32>
    %75 = vector.multi_reduction <add>, %2, %cst_37 [1] : vector<16x32xf32> to vector<16xf32>
    %76 = vector.shape_cast %75 : vector<16xf32> to vector<16x1xf32>
    %cst_38 = arith.constant 3.200000e+01 : f32
    %77 = vector.broadcast %cst_38 : f32 to vector<16x1xf32>
    %78 = arith.divf %76, %77 : vector<16x1xf32>
    %79 = vector.broadcast %78 : vector<16x1xf32> to vector<16x32xf32>
    %80 = arith.subf %2, %79 : vector<16x32xf32>
    %81 = arith.mulf %80, %80 : vector<16x32xf32>
    %cst_39 = arith.constant dense<0.000000e+00> : vector<16xf32>
    %82 = vector.multi_reduction <add>, %81, %cst_39 [1] : vector<16x32xf32> to vector<16xf32>
    %83 = vector.shape_cast %82 : vector<16xf32> to vector<16x1xf32>
    %cst_40 = arith.constant 3.200000e+01 : f32
    %84 = vector.broadcast %cst_40 : f32 to vector<16x1xf32>
    %85 = arith.divf %83, %84 : vector<16x1xf32>
    %86 = vector.broadcast %78 : vector<16x1xf32> to vector<16x32xf32>
    %87 = arith.subf %2, %86 : vector<16x32xf32>
    %cst_41 = arith.constant 9.99999974E-6 : f32
    %88 = vector.broadcast %cst_41 : f32 to vector<16x1xf32>
    %89 = arith.addf %85, %88 : vector<16x1xf32>
    %90 = math.rsqrt %89 : vector<16x1xf32>
    %91 = vector.broadcast %90 : vector<16x1xf32> to vector<16x32xf32>
    %92 = arith.mulf %87, %91 : vector<16x32xf32>
    %93 = vector.broadcast %73 : vector<1x32xf32> to vector<16x32xf32>
    %94 = arith.mulf %92, %93 : vector<16x32xf32>
    %95 = vector.broadcast %74 : vector<1x32xf32> to vector<16x32xf32>
    %96 = arith.addf %94, %95 : vector<16x32xf32>
    %97 = arith.addf %96, %72 : vector<16x32xf32>
    %98 = vector.extract_strided_slice %0 {offsets = [0, 4, 0], sizes = [2, 1, 32], strides = [1, 1, 1]} : vector<2x8x32xf32> to vector<2x1x32xf32>
    %99 = vector.shape_cast %98 : vector<2x1x32xf32> to vector<2x32xf32>
    %100 = vector.shape_cast %97 : vector<16x32xf32> to vector<2x8x32xf32>
    %101 = vector.extract_strided_slice %100 {offsets = [0, 4, 0], sizes = [2, 1, 32], strides = [1, 1, 1]} : vector<2x8x32xf32> to vector<2x1x32xf32>
    %102 = vector.shape_cast %101 : vector<2x1x32xf32> to vector<2x32xf32>
    %c0_42 = arith.constant 0 : index
    %c0_43 = arith.constant 0 : index
    %103 = vector.load %arg14[%c0_42, %c0_43] : memref<32x32xf32, #tpu.memory_space<vmem>>, vector<32x32xf32>
    %cst_44 = arith.constant dense<0.000000e+00> : vector<2x32xf32>
    %104 = tpu.matmul %102, %103, %cst_44 {dimension_numbers = #tpu.dot_dimension_numbers<[1], [0], [0], [1], [0, 0, 1, 1], [], []>} : vector<2x32xf32>, vector<32x32xf32>, vector<2x32xf32> -> vector<2x32xf32>
    %c0_45 = arith.constant 0 : index
    %c0_46 = arith.constant 0 : index
    %105 = vector.load %arg15[%c0_45, %c0_46] : memref<1x32xf32, #tpu.memory_space<vmem>>, vector<1x32xf32>
    %106 = vector.broadcast %105 : vector<1x32xf32> to vector<2x32xf32>
    %107 = arith.addf %104, %106 : vector<2x32xf32>
    %cst_47 = arith.constant 0.353553265 : f32
    %108 = vector.broadcast %cst_47 : f32 to vector<2x32xf32>
    %109 = arith.mulf %107, %108 : vector<2x32xf32>
    %c0_48 = arith.constant 0 : index
    %c0_49 = arith.constant 0 : index
    %110 = vector.load %arg16[%c0_48, %c0_49] : memref<32x32xf32, #tpu.memory_space<vmem>>, vector<32x32xf32>
    %cst_50 = arith.constant dense<0.000000e+00> : vector<16x32xf32>
    %111 = tpu.matmul %97, %110, %cst_50 {dimension_numbers = #tpu.dot_dimension_numbers<[1], [0], [0], [1], [0, 0, 1, 1], [], []>} : vector<16x32xf32>, vector<32x32xf32>, vector<16x32xf32> -> vector<16x32xf32>
    %c0_51 = arith.constant 0 : index
    %c0_52 = arith.constant 0 : index
    %112 = vector.load %arg17[%c0_51, %c0_52] : memref<1x32xf32, #tpu.memory_space<vmem>>, vector<1x32xf32>
    %113 = vector.broadcast %112 : vector<1x32xf32> to vector<16x32xf32>
    %114 = arith.addf %111, %113 : vector<16x32xf32>
    %c0_53 = arith.constant 0 : index
    %c0_54 = arith.constant 0 : index
    %115 = vector.load %arg18[%c0_53, %c0_54] : memref<32x32xf32, #tpu.memory_space<vmem>>, vector<32x32xf32>
    %cst_55 = arith.constant dense<0.000000e+00> : vector<16x32xf32>
    %116 = tpu.matmul %97, %115, %cst_55 {dimension_numbers = #tpu.dot_dimension_numbers<[1], [0], [0], [1], [0, 0, 1, 1], [], []>} : vector<16x32xf32>, vector<32x32xf32>, vector<16x32xf32> -> vector<16x32xf32>
    %c0_56 = arith.constant 0 : index
    %c0_57 = arith.constant 0 : index
    %117 = vector.load %arg19[%c0_56, %c0_57] : memref<1x32xf32, #tpu.memory_space<vmem>>, vector<1x32xf32>
    %118 = vector.broadcast %117 : vector<1x32xf32> to vector<16x32xf32>
    %119 = arith.addf %116, %118 : vector<16x32xf32>
    %120 = vector.shape_cast %114 : vector<16x32xf32> to vector<2x8x32xf32>
    %121 = vector.shape_cast %119 : vector<16x32xf32> to vector<2x8x32xf32>
    %122 = vector.shape_cast %109 : vector<2x32xf32> to vector<2x1x32xf32>
    %123 = vector.broadcast %122 : vector<2x1x32xf32> to vector<2x8x32xf32>
    %124 = arith.mulf %120, %123 : vector<2x8x32xf32>
    %125 = vector.shape_cast %124 : vector<2x8x32xf32> to vector<16x32xf32>
    %c0_58 = arith.constant 0 : index
    %c0_59 = arith.constant 0 : index
    %126 = vector.load %arg23[%c0_58, %c0_59] : memref<32x4xf32, #tpu.memory_space<vmem>>, vector<32x4xf32>
    %cst_60 = arith.constant dense<0.000000e+00> : vector<16x4xf32>
    %127 = tpu.matmul %125, %126, %cst_60 {dimension_numbers = #tpu.dot_dimension_numbers<[1], [0], [0], [1], [0, 0, 1, 1], [], []>} : vector<16x32xf32>, vector<32x4xf32>, vector<16x4xf32> -> vector<16x4xf32>
    %128 = vector.shape_cast %127 : vector<16x4xf32> to vector<2x8x4xf32>
    %c0_61 = arith.constant 0 : index
    %c0_62 = arith.constant 0 : index
    %129 = vector.load %arg22[%c0_61, %c0_62] : memref<8x4xf32, #tpu.memory_space<vmem>>, vector<8x4xf32>
    %cst_63 = arith.constant -1.000000e+01 : f32
    %cst_64 = arith.constant 1.000000e+01 : f32
    %130 = vector.broadcast %cst_63 : f32 to vector<8x4xf32>
    %131 = arith.maximumf %130, %129 : vector<8x4xf32>
    %132 = vector.broadcast %cst_64 : f32 to vector<8x4xf32>
    %133 = arith.minimumf %132, %131 : vector<8x4xf32>
    %134 = vector.shape_cast %133 : vector<8x4xf32> to vector<1x8x4xf32>
    %135 = vector.broadcast %134 : vector<1x8x4xf32> to vector<2x8x4xf32>
    %136 = arith.addf %128, %135 : vector<2x8x4xf32>
    %cst_65 = arith.constant -1.000000e+01 : f32
    %cst_66 = arith.constant 1.000000e+01 : f32
    %137 = vector.broadcast %cst_65 : f32 to vector<2x8x4xf32>
    %138 = arith.maximumf %137, %136 : vector<2x8x4xf32>
    %139 = vector.broadcast %cst_66 : f32 to vector<2x8x4xf32>
    %140 = arith.minimumf %139, %138 : vector<2x8x4xf32>
    %cst_67 = arith.constant dense<0xFF800000> : vector<2x4xf32>
    %141 = vector.multi_reduction <maximumf>, %140, %cst_67 [1] : vector<2x8x4xf32> to vector<2x4xf32>
    %142 = vector.shape_cast %141 : vector<2x4xf32> to vector<2x1x4xf32>
    %143 = vector.broadcast %142 : vector<2x1x4xf32> to vector<2x8x4xf32>
    %144 = arith.subf %140, %143 : vector<2x8x4xf32>
    %145 = math.exp %144 : vector<2x8x4xf32>
    %cst_68 = arith.constant dense<0.000000e+00> : vector<2x4xf32>
    %146 = vector.multi_reduction <add>, %145, %cst_68 [1] : vector<2x8x4xf32> to vector<2x4xf32>
    %147 = vector.shape_cast %146 : vector<2x4xf32> to vector<2x1x4xf32>
    %148 = tpu.reciprocal %147 {approx = true} : vector<2x1x4xf32> -> vector<2x1x4xf32>
    %149 = vector.broadcast %148 : vector<2x1x4xf32> to vector<2x8x4xf32>
    %150 = arith.mulf %145, %149 : vector<2x8x4xf32>
    %151 = vector.shape_cast %150 : vector<2x8x4xf32> to vector<16x4xf32>
    %c0_69 = arith.constant 0 : index
    %c0_70 = arith.constant 0 : index
    %152 = vector.load %arg24[%c0_69, %c0_70] : memref<4x32xf32, #tpu.memory_space<vmem>>, vector<4x32xf32>
    %cst_71 = arith.constant dense<0.000000e+00> : vector<16x32xf32>
    %153 = tpu.matmul %151, %152, %cst_71 {dimension_numbers = #tpu.dot_dimension_numbers<[1], [0], [0], [1], [0, 0, 1, 1], [], []>} : vector<16x4xf32>, vector<4x32xf32>, vector<16x32xf32> -> vector<16x32xf32>
    %154 = vector.shape_cast %153 : vector<16x32xf32> to vector<2x8x32xf32>
    %155 = arith.mulf %154, %121 : vector<2x8x32xf32>
    %cst_72 = arith.constant dense<0.000000e+00> : vector<2x32xf32>
    %156 = vector.multi_reduction <add>, %155, %cst_72 [1] : vector<2x8x32xf32> to vector<2x32xf32>
    %c0_73 = arith.constant 0 : index
    %c0_74 = arith.constant 0 : index
    %157 = vector.load %arg20[%c0_73, %c0_74] : memref<32x32xf32, #tpu.memory_space<vmem>>, vector<32x32xf32>
    %cst_75 = arith.constant dense<0.000000e+00> : vector<2x32xf32>
    %158 = tpu.matmul %156, %157, %cst_75 {dimension_numbers = #tpu.dot_dimension_numbers<[1], [0], [0], [1], [0, 0, 1, 1], [], []>} : vector<2x32xf32>, vector<32x32xf32>, vector<2x32xf32> -> vector<2x32xf32>
    %c0_76 = arith.constant 0 : index
    %c0_77 = arith.constant 0 : index
    %159 = vector.load %arg21[%c0_76, %c0_77] : memref<1x32xf32, #tpu.memory_space<vmem>>, vector<1x32xf32>
    %160 = vector.broadcast %159 : vector<1x32xf32> to vector<2x32xf32>
    %161 = arith.addf %158, %160 : vector<2x32xf32>
    %162 = arith.addf %161, %99 : vector<2x32xf32>
    %c0_78 = arith.constant 0 : index
    %c0_79 = arith.constant 0 : index
    %163 = vector.load %arg25[%c0_78, %c0_79] : memref<1x32xf32, #tpu.memory_space<vmem>>, vector<1x32xf32>
    %c0_80 = arith.constant 0 : index
    %c0_81 = arith.constant 0 : index
    %164 = vector.load %arg26[%c0_80, %c0_81] : memref<1x32xf32, #tpu.memory_space<vmem>>, vector<1x32xf32>
    %cst_82 = arith.constant dense<0.000000e+00> : vector<2xf32>
    %165 = vector.multi_reduction <add>, %162, %cst_82 [1] : vector<2x32xf32> to vector<2xf32>
    %166 = vector.shape_cast %165 : vector<2xf32> to vector<2x1xf32>
    %cst_83 = arith.constant 3.200000e+01 : f32
    %167 = vector.broadcast %cst_83 : f32 to vector<2x1xf32>
    %168 = arith.divf %166, %167 : vector<2x1xf32>
    %169 = vector.broadcast %168 : vector<2x1xf32> to vector<2x32xf32>
    %170 = arith.subf %162, %169 : vector<2x32xf32>
    %171 = arith.mulf %170, %170 : vector<2x32xf32>
    %cst_84 = arith.constant dense<0.000000e+00> : vector<2xf32>
    %172 = vector.multi_reduction <add>, %171, %cst_84 [1] : vector<2x32xf32> to vector<2xf32>
    %173 = vector.shape_cast %172 : vector<2xf32> to vector<2x1xf32>
    %cst_85 = arith.constant 3.200000e+01 : f32
    %174 = vector.broadcast %cst_85 : f32 to vector<2x1xf32>
    %175 = arith.divf %173, %174 : vector<2x1xf32>
    %176 = vector.broadcast %168 : vector<2x1xf32> to vector<2x32xf32>
    %177 = arith.subf %162, %176 : vector<2x32xf32>
    %cst_86 = arith.constant 9.99999974E-6 : f32
    %178 = vector.broadcast %cst_86 : f32 to vector<2x1xf32>
    %179 = arith.addf %175, %178 : vector<2x1xf32>
    %180 = math.rsqrt %179 : vector<2x1xf32>
    %181 = vector.broadcast %180 : vector<2x1xf32> to vector<2x32xf32>
    %182 = arith.mulf %177, %181 : vector<2x32xf32>
    %183 = vector.broadcast %163 : vector<1x32xf32> to vector<2x32xf32>
    %184 = arith.mulf %182, %183 : vector<2x32xf32>
    %185 = vector.broadcast %164 : vector<1x32xf32> to vector<2x32xf32>
    %186 = arith.addf %184, %185 : vector<2x32xf32>
    %c0_87 = arith.constant 0 : index
    %c0_88 = arith.constant 0 : index
    %187 = vector.load %arg27[%c0_87, %c0_88] : memref<32x128xf32, #tpu.memory_space<vmem>>, vector<32x128xf32>
    %cst_89 = arith.constant dense<0.000000e+00> : vector<2x128xf32>
    %188 = tpu.matmul %186, %187, %cst_89 {dimension_numbers = #tpu.dot_dimension_numbers<[1], [0], [0], [1], [0, 0, 1, 1], [], []>} : vector<2x32xf32>, vector<32x128xf32>, vector<2x128xf32> -> vector<2x128xf32>
    %c0_90 = arith.constant 0 : index
    %c0_91 = arith.constant 0 : index
    %189 = vector.load %arg28[%c0_90, %c0_91] : memref<1x128xf32, #tpu.memory_space<vmem>>, vector<1x128xf32>
    %190 = vector.broadcast %189 : vector<1x128xf32> to vector<2x128xf32>
    %191 = arith.addf %188, %190 : vector<2x128xf32>
    %cst_92 = arith.constant 5.000000e-01 : f32
    %192 = vector.broadcast %cst_92 : f32 to vector<2x128xf32>
    %193 = arith.mulf %192, %191 : vector<2x128xf32>
    %cst_93 = arith.constant 0.707106769 : f32
    %194 = vector.broadcast %cst_93 : f32 to vector<2x128xf32>
    %195 = arith.mulf %191, %194 : vector<2x128xf32>
    %cst_94 = arith.constant 0.000000e+00 : f32
    %196 = vector.broadcast %cst_94 : f32 to vector<2x128xf32>
    %197 = arith.cmpf oge, %195, %196 : vector<2x128xf32>
    %cst_95 = arith.constant 1.000000e+00 : f32
    %cst_96 = arith.constant -1.000000e+00 : f32
    %198 = vector.broadcast %cst_95 : f32 to vector<2x128xf32>
    %199 = vector.broadcast %cst_96 : f32 to vector<2x128xf32>
    %200 = arith.select %197, %198, %199 : vector<2x128xi1>, vector<2x128xf32>
    %201 = math.absf %195 : vector<2x128xf32>
    %cst_97 = arith.constant 0.327591091 : f32
    %202 = vector.broadcast %cst_97 : f32 to vector<2x128xf32>
    %203 = arith.mulf %202, %201 : vector<2x128xf32>
    %cst_98 = arith.constant 1.000000e+00 : f32
    %204 = vector.broadcast %cst_98 : f32 to vector<2x128xf32>
    %205 = arith.addf %204, %203 : vector<2x128xf32>
    %cst_99 = arith.constant 1.000000e+00 : f32
    %206 = vector.broadcast %cst_99 : f32 to vector<2x128xf32>
    %207 = arith.divf %206, %205 : vector<2x128xf32>
    %cst_100 = arith.constant 1.06140542 : f32
    %208 = vector.broadcast %cst_100 : f32 to vector<2x128xf32>
    %209 = arith.mulf %208, %207 : vector<2x128xf32>
    %cst_101 = arith.constant 1.45315206 : f32
    %210 = vector.broadcast %cst_101 : f32 to vector<2x128xf32>
    %211 = arith.subf %209, %210 : vector<2x128xf32>
    %212 = arith.mulf %211, %207 : vector<2x128xf32>
    %cst_102 = arith.constant 1.42141378 : f32
    %213 = vector.broadcast %cst_102 : f32 to vector<2x128xf32>
    %214 = arith.addf %212, %213 : vector<2x128xf32>
    %215 = arith.mulf %214, %207 : vector<2x128xf32>
    %cst_103 = arith.constant 0.284496725 : f32
    %216 = vector.broadcast %cst_103 : f32 to vector<2x128xf32>
    %217 = arith.subf %215, %216 : vector<2x128xf32>
    %218 = arith.mulf %217, %207 : vector<2x128xf32>
    %cst_104 = arith.constant 0.254829586 : f32
    %219 = vector.broadcast %cst_104 : f32 to vector<2x128xf32>
    %220 = arith.addf %218, %219 : vector<2x128xf32>
    %221 = arith.mulf %220, %207 : vector<2x128xf32>
    %cst_105 = arith.constant 0.000000e+00 : f32
    %222 = vector.broadcast %cst_105 : f32 to vector<2x128xf32>
    %223 = arith.subf %222, %201 : vector<2x128xf32>
    %224 = arith.mulf %223, %201 : vector<2x128xf32>
    %225 = math.exp %224 : vector<2x128xf32>
    %226 = arith.mulf %221, %225 : vector<2x128xf32>
    %cst_106 = arith.constant 1.000000e+00 : f32
    %227 = vector.broadcast %cst_106 : f32 to vector<2x128xf32>
    %228 = arith.subf %227, %226 : vector<2x128xf32>
    %229 = arith.mulf %200, %228 : vector<2x128xf32>
    %cst_107 = arith.constant 1.000000e+00 : f32
    %230 = vector.broadcast %cst_107 : f32 to vector<2x128xf32>
    %231 = arith.addf %230, %229 : vector<2x128xf32>
    %232 = arith.mulf %193, %231 : vector<2x128xf32>
    %c0_108 = arith.constant 0 : index
    %c0_109 = arith.constant 0 : index
    %233 = vector.load %arg29[%c0_108, %c0_109] : memref<128x32xf32, #tpu.memory_space<vmem>>, vector<128x32xf32>
    %cst_110 = arith.constant dense<0.000000e+00> : vector<2x32xf32>
    %234 = tpu.matmul %232, %233, %cst_110 {dimension_numbers = #tpu.dot_dimension_numbers<[1], [0], [0], [1], [0, 0, 1, 1], [], []>} : vector<2x128xf32>, vector<128x32xf32>, vector<2x32xf32> -> vector<2x32xf32>
    %c0_111 = arith.constant 0 : index
    %c0_112 = arith.constant 0 : index
    %235 = vector.load %arg30[%c0_111, %c0_112] : memref<1x32xf32, #tpu.memory_space<vmem>>, vector<1x32xf32>
    %236 = vector.broadcast %235 : vector<1x32xf32> to vector<2x32xf32>
    %237 = arith.addf %234, %236 : vector<2x32xf32>
    %238 = arith.addf %237, %162 : vector<2x32xf32>
    %c0_113 = arith.constant 0 : index
    %c0_114 = arith.constant 0 : index
    %239 = vector.load %arg31[%c0_113, %c0_114] : memref<1x32xf32, #tpu.memory_space<vmem>>, vector<1x32xf32>
    %c0_115 = arith.constant 0 : index
    %c0_116 = arith.constant 0 : index
    %240 = vector.load %arg32[%c0_115, %c0_116] : memref<1x32xf32, #tpu.memory_space<vmem>>, vector<1x32xf32>
    %cst_117 = arith.constant dense<0.000000e+00> : vector<2xf32>
    %241 = vector.multi_reduction <add>, %238, %cst_117 [1] : vector<2x32xf32> to vector<2xf32>
    %242 = vector.shape_cast %241 : vector<2xf32> to vector<2x1xf32>
    %cst_118 = arith.constant 3.200000e+01 : f32
    %243 = vector.broadcast %cst_118 : f32 to vector<2x1xf32>
    %244 = arith.divf %242, %243 : vector<2x1xf32>
    %245 = vector.broadcast %244 : vector<2x1xf32> to vector<2x32xf32>
    %246 = arith.subf %238, %245 : vector<2x32xf32>
    %247 = arith.mulf %246, %246 : vector<2x32xf32>
    %cst_119 = arith.constant dense<0.000000e+00> : vector<2xf32>
    %248 = vector.multi_reduction <add>, %247, %cst_119 [1] : vector<2x32xf32> to vector<2xf32>
    %249 = vector.shape_cast %248 : vector<2xf32> to vector<2x1xf32>
    %cst_120 = arith.constant 3.200000e+01 : f32
    %250 = vector.broadcast %cst_120 : f32 to vector<2x1xf32>
    %251 = arith.divf %249, %250 : vector<2x1xf32>
    %252 = vector.broadcast %244 : vector<2x1xf32> to vector<2x32xf32>
    %253 = arith.subf %238, %252 : vector<2x32xf32>
    %cst_121 = arith.constant 9.99999974E-6 : f32
    %254 = vector.broadcast %cst_121 : f32 to vector<2x1xf32>
    %255 = arith.addf %251, %254 : vector<2x1xf32>
    %256 = math.rsqrt %255 : vector<2x1xf32>
    %257 = vector.broadcast %256 : vector<2x1xf32> to vector<2x32xf32>
    %258 = arith.mulf %253, %257 : vector<2x32xf32>
    %259 = vector.broadcast %239 : vector<1x32xf32> to vector<2x32xf32>
    %260 = arith.mulf %258, %259 : vector<2x32xf32>
    %261 = vector.broadcast %240 : vector<1x32xf32> to vector<2x32xf32>
    %262 = arith.addf %260, %261 : vector<2x32xf32>
    %c0_122 = arith.constant 0 : index
    %c0_123 = arith.constant 0 : index
    %263 = vector.load %arg33[%c0_122, %c0_123] : memref<32x32xf32, #tpu.memory_space<vmem>>, vector<32x32xf32>
    %cst_124 = arith.constant dense<0.000000e+00> : vector<2x32xf32>
    %264 = tpu.matmul %262, %263, %cst_124 {dimension_numbers = #tpu.dot_dimension_numbers<[1], [0], [0], [1], [0, 0, 1, 1], [], []>} : vector<2x32xf32>, vector<32x32xf32>, vector<2x32xf32> -> vector<2x32xf32>
    %c0_125 = arith.constant 0 : index
    %c0_126 = arith.constant 0 : index
    %265 = vector.load %arg34[%c0_125, %c0_126] : memref<1x32xf32, #tpu.memory_space<vmem>>, vector<1x32xf32>
    %266 = vector.broadcast %265 : vector<1x32xf32> to vector<2x32xf32>
    %267 = arith.addf %264, %266 : vector<2x32xf32>
    %cst_127 = arith.constant 0.000000e+00 : f32
    %268 = vector.broadcast %cst_127 : f32 to vector<2x32xf32>
    %269 = arith.maximumf %267, %268 : vector<2x32xf32>
    %c0_128 = arith.constant 0 : index
    %c0_129 = arith.constant 0 : index
    %270 = vector.load %arg35[%c0_128, %c0_129] : memref<32x16xf32, #tpu.memory_space<vmem>>, vector<32x16xf32>
    %cst_130 = arith.constant dense<0.000000e+00> : vector<2x16xf32>
    %271 = tpu.matmul %269, %270, %cst_130 {dimension_numbers = #tpu.dot_dimension_numbers<[1], [0], [0], [1], [0, 0, 1, 1], [], []>} : vector<2x32xf32>, vector<32x16xf32>, vector<2x16xf32> -> vector<2x16xf32>
    %c0_131 = arith.constant 0 : index
    %c0_132 = arith.constant 0 : index
    %272 = vector.load %arg36[%c0_131, %c0_132] : memref<1x16xf32, #tpu.memory_space<vmem>>, vector<1x16xf32>
    %273 = vector.broadcast %272 : vector<1x16xf32> to vector<2x16xf32>
    %274 = arith.addf %271, %273 : vector<2x16xf32>
    %cst_133 = arith.constant 0.000000e+00 : f32
    %275 = vector.broadcast %cst_133 : f32 to vector<2x16xf32>
    %276 = arith.maximumf %274, %275 : vector<2x16xf32>
    %c0_134 = arith.constant 0 : index
    %c0_135 = arith.constant 0 : index
    %277 = vector.load %arg37[%c0_134, %c0_135] : memref<16x128xf32, #tpu.memory_space<vmem>>, vector<16x128xf32>
    %cst_136 = arith.constant dense<0.000000e+00> : vector<2x128xf32>
    %278 = tpu.matmul %276, %277, %cst_136 {dimension_numbers = #tpu.dot_dimension_numbers<[1], [0], [0], [1], [0, 0, 1, 1], [], []>} : vector<2x16xf32>, vector<16x128xf32>, vector<2x128xf32> -> vector<2x128xf32>
    %c0_137 = arith.constant 0 : index
    %c0_138 = arith.constant 0 : index
    %279 = vector.load %arg38[%c0_137, %c0_138] : memref<1x128xf32, #tpu.memory_space<vmem>>, vector<1x128xf32>
    %280 = vector.broadcast %279 : vector<1x128xf32> to vector<2x128xf32>
    %281 = arith.addf %278, %280 : vector<2x128xf32>
    %c0_139 = arith.constant 0 : index
    %c0_140 = arith.constant 0 : index
    %c0_141 = arith.constant 0 : index
    %282 = vector.load %arg39[%c0_139, %c0_140, %c0_141] : memref<1x2x128xf32, #tpu.memory_space<vmem>>, vector<1x2x128xf32>
    %283 = vector.shape_cast %282 : vector<1x2x128xf32> to vector<2x128xf32>
    %284 = vector.shape_cast %281 : vector<2x128xf32> to vector<1x2x128xf32>
    tpu.vector_store %arg39[%c0_139, %c0_140, %c0_141], %284 {strides = array<i32>} : memref<1x2x128xf32, #tpu.memory_space<vmem>>, vector<1x2x128xf32>,
    return
  }
  func.func @transform_0(%arg0: i32) -> (i32, i32, i32) {
    %c0_i32 = arith.constant 0 : i32
    %c0_i32_0 = arith.constant 0 : i32
    %c0_i32_1 = arith.constant 0 : i32
    return %arg0, %c0_i32, %c0_i32_0 : i32, i32, i32
  }
  func.func @transform_1(%arg0: i32) -> (i32, i32, i32) {
    %c0_i32 = arith.constant 0 : i32
    %c0_i32_0 = arith.constant 0 : i32
    %c0_i32_1 = arith.constant 0 : i32
    return %arg0, %c0_i32, %c0_i32_0 : i32, i32, i32
  }
  func.func @transform_2(%arg0: i32) -> (i32, i32) {
    %c0_i32 = arith.constant 0 : i32
    %c0_i32_0 = arith.constant 0 : i32
    %c0_i32_1 = arith.constant 0 : i32
    return %c0_i32, %c0_i32_0 : i32, i32
  }
  func.func @transform_3(%arg0: i32) -> (i32, i32) {
    %c0_i32 = arith.constant 0 : i32
    %c0_i32_0 = arith.constant 0 : i32
    %c0_i32_1 = arith.constant 0 : i32
    return %c0_i32, %c0_i32_0 : i32, i32
  }
  func.func @transform_4(%arg0: i32) -> (i32, i32) {
    %c0_i32 = arith.constant 0 : i32
    %c0_i32_0 = arith.constant 0 : i32
    %c0_i32_1 = arith.constant 0 : i32
    return %c0_i32, %c0_i32_0 : i32, i32
  }
  func.func @transform_5(%arg0: i32) -> (i32, i32) {
    %c0_i32 = arith.constant 0 : i32
    %c0_i32_0 = arith.constant 0 : i32
    %c0_i32_1 = arith.constant 0 : i32
    return %c0_i32, %c0_i32_0 : i32, i32
  }
  func.func @transform_6(%arg0: i32) -> (i32, i32) {
    %c0_i32 = arith.constant 0 : i32
    %c0_i32_0 = arith.constant 0 : i32
    %c0_i32_1 = arith.constant 0 : i32
    return %c0_i32, %c0_i32_0 : i32, i32
  }
  func.func @transform_7(%arg0: i32) -> (i32, i32) {
    %c0_i32 = arith.constant 0 : i32
    %c0_i32_0 = arith.constant 0 : i32
    %c0_i32_1 = arith.constant 0 : i32
    return %c0_i32, %c0_i32_0 : i32, i32
  }
  func.func @transform_8(%arg0: i32) -> (i32, i32) {
    %c0_i32 = arith.constant 0 : i32
    %c0_i32_0 = arith.constant 0 : i32
    %c0_i32_1 = arith.constant 0 : i32
    return %c0_i32, %c0_i32_0 : i32, i32
  }
  func.func @transform_9(%arg0: i32) -> (i32, i32) {
    %c0_i32 = arith.constant 0 : i32
    %c0_i32_0 = arith.constant 0 : i32
    %c0_i32_1 = arith.constant 0 : i32
    return %c0_i32, %c0_i32_0 : i32, i32
  }
  func.func @transform_10(%arg0: i32) -> (i32, i32) {
    %c0_i32 = arith.constant 0 : i32
    %c0_i32_0 = arith.constant 0 : i32
    %c0_i32_1 = arith.constant 0 : i32
    return %c0_i32, %c0_i32_0 : i32, i32
  }
  func.func @transform_11(%arg0: i32) -> (i32, i32) {
    %c0_i32 = arith.constant 0 : i32
    %c0_i32_0 = arith.constant 0 : i32
    %c0_i32_1 = arith.constant 0 : i32
    return %c0_i32, %c0_i32_0 : i32, i32
  }
  func.func @transform_12(%arg0: i32) -> (i32, i32) {
    %c0_i32 = arith.constant 0 : i32
    %c0_i32_0 = arith.constant 0 : i32
    %c0_i32_1 = arith.constant 0 : i32
    return %c0_i32, %c0_i32_0 : i32, i32
  }
  func.func @transform_13(%arg0: i32) -> (i32, i32) {
    %c0_i32 = arith.constant 0 : i32
    %c0_i32_0 = arith.constant 0 : i32
    %c0_i32_1 = arith.constant 0 : i32
    return %c0_i32, %c0_i32_0 : i32, i32
  }
  func.func @transform_14(%arg0: i32) -> (i32, i32) {
    %c0_i32 = arith.constant 0 : i32
    %c0_i32_0 = arith.constant 0 : i32
    %c0_i32_1 = arith.constant 0 : i32
    return %c0_i32, %c0_i32_0 : i32, i32
  }
  func.func @transform_15(%arg0: i32) -> (i32, i32) {
    %c0_i32 = arith.constant 0 : i32
    %c0_i32_0 = arith.constant 0 : i32
    %c0_i32_1 = arith.constant 0 : i32
    return %c0_i32, %c0_i32_0 : i32, i32
  }
  func.func @transform_16(%arg0: i32) -> (i32, i32) {
    %c0_i32 = arith.constant 0 : i32
    %c0_i32_0 = arith.constant 0 : i32
    %c0_i32_1 = arith.constant 0 : i32
    return %c0_i32, %c0_i32_0 : i32, i32
  }
  func.func @transform_17(%arg0: i32) -> (i32, i32) {
    %c0_i32 = arith.constant 0 : i32
    %c0_i32_0 = arith.constant 0 : i32
    %c0_i32_1 = arith.constant 0 : i32
    return %c0_i32, %c0_i32_0 : i32, i32
  }
  func.func @transform_18(%arg0: i32) -> (i32, i32) {
    %c0_i32 = arith.constant 0 : i32
    %c0_i32_0 = arith.constant 0 : i32
    %c0_i32_1 = arith.constant 0 : i32
    return %c0_i32, %c0_i32_0 : i32, i32
  }
  func.func @transform_19(%arg0: i32) -> (i32, i32) {
    %c0_i32 = arith.constant 0 : i32
    %c0_i32_0 = arith.constant 0 : i32
    %c0_i32_1 = arith.constant 0 : i32
    return %c0_i32, %c0_i32_0 : i32, i32
  }
  func.func @transform_20(%arg0: i32) -> (i32, i32) {
    %c0_i32 = arith.constant 0 : i32
    %c0_i32_0 = arith.constant 0 : i32
    %c0_i32_1 = arith.constant 0 : i32
    return %c0_i32, %c0_i32_0 : i32, i32
  }
  func.func @transform_21(%arg0: i32) -> (i32, i32) {
    %c0_i32 = arith.constant 0 : i32
    %c0_i32_0 = arith.constant 0 : i32
    %c0_i32_1 = arith.constant 0 : i32
    return %c0_i32, %c0_i32_0 : i32, i32
  }
  func.func @transform_22(%arg0: i32) -> (i32, i32) {
    %c0_i32 = arith.constant 0 : i32
    %c0_i32_0 = arith.constant 0 : i32
    %c0_i32_1 = arith.constant 0 : i32
    return %c0_i32, %c0_i32_0 : i32, i32
  }
  func.func @transform_23(%arg0: i32) -> (i32, i32) {
    %c0_i32 = arith.constant 0 : i32
    %c0_i32_0 = arith.constant 0 : i32
    %c0_i32_1 = arith.constant 0 : i32
    return %c0_i32, %c0_i32_0 : i32, i32
  }
  func.func @transform_24(%arg0: i32) -> (i32, i32) {
    %c0_i32 = arith.constant 0 : i32
    %c0_i32_0 = arith.constant 0 : i32
    %c0_i32_1 = arith.constant 0 : i32
    return %c0_i32, %c0_i32_0 : i32, i32
  }
  func.func @transform_25(%arg0: i32) -> (i32, i32) {
    %c0_i32 = arith.constant 0 : i32
    %c0_i32_0 = arith.constant 0 : i32
    %c0_i32_1 = arith.constant 0 : i32
    return %c0_i32, %c0_i32_0 : i32, i32
  }
  func.func @transform_26(%arg0: i32) -> (i32, i32) {
    %c0_i32 = arith.constant 0 : i32
    %c0_i32_0 = arith.constant 0 : i32
    %c0_i32_1 = arith.constant 0 : i32
    return %c0_i32, %c0_i32_0 : i32, i32
  }
  func.func @transform_27(%arg0: i32) -> (i32, i32) {
    %c0_i32 = arith.constant 0 : i32
    %c0_i32_0 = arith.constant 0 : i32
    %c0_i32_1 = arith.constant 0 : i32
    return %c0_i32, %c0_i32_0 : i32, i32
  }
  func.func @transform_28(%arg0: i32) -> (i32, i32) {
    %c0_i32 = arith.constant 0 : i32
    %c0_i32_0 = arith.constant 0 : i32
    %c0_i32_1 = arith.constant 0 : i32
    return %c0_i32, %c0_i32_0 : i32, i32
  }
  func.func @transform_29(%arg0: i32) -> (i32, i32) {
    %c0_i32 = arith.constant 0 : i32
    %c0_i32_0 = arith.constant 0 : i32
    %c0_i32_1 = arith.constant 0 : i32
    return %c0_i32, %c0_i32_0 : i32, i32
  }
  func.func @transform_30(%arg0: i32) -> (i32, i32) {
    %c0_i32 = arith.constant 0 : i32
    %c0_i32_0 = arith.constant 0 : i32
    %c0_i32_1 = arith.constant 0 : i32
    return %c0_i32, %c0_i32_0 : i32, i32
  }
  func.func @transform_31(%arg0: i32) -> (i32, i32) {
    %c0_i32 = arith.constant 0 : i32
    %c0_i32_0 = arith.constant 0 : i32
    %c0_i32_1 = arith.constant 0 : i32
    return %c0_i32, %c0_i32_0 : i32, i32
  }
  func.func @transform_32(%arg0: i32) -> (i32, i32) {
    %c0_i32 = arith.constant 0 : i32
    %c0_i32_0 = arith.constant 0 : i32
    %c0_i32_1 = arith.constant 0 : i32
    return %c0_i32, %c0_i32_0 : i32, i32
  }
  func.func @transform_33(%arg0: i32) -> (i32, i32) {
    %c0_i32 = arith.constant 0 : i32
    %c0_i32_0 = arith.constant 0 : i32
    %c0_i32_1 = arith.constant 0 : i32
    return %c0_i32, %c0_i32_0 : i32, i32
  }
  func.func @transform_34(%arg0: i32) -> (i32, i32) {
    %c0_i32 = arith.constant 0 : i32
    %c0_i32_0 = arith.constant 0 : i32
    %c0_i32_1 = arith.constant 0 : i32
    return %c0_i32, %c0_i32_0 : i32, i32
  }
  func.func @transform_35(%arg0: i32) -> (i32, i32) {
    %c0_i32 = arith.constant 0 : i32
    %c0_i32_0 = arith.constant 0 : i32
    %c0_i32_1 = arith.constant 0 : i32
    return %c0_i32, %c0_i32_0 : i32, i32
  }
  func.func @transform_36(%arg0: i32) -> (i32, i32) {
    %c0_i32 = arith.constant 0 : i32
    %c0_i32_0 = arith.constant 0 : i32
    %c0_i32_1 = arith.constant 0 : i32
    return %c0_i32, %c0_i32_0 : i32, i32
  }
  func.func @transform_37(%arg0: i32) -> (i32, i32) {
    %c0_i32 = arith.constant 0 : i32
    %c0_i32_0 = arith.constant 0 : i32
    %c0_i32_1 = arith.constant 0 : i32
    return %c0_i32, %c0_i32_0 : i32, i32
  }
  func.func @transform_38(%arg0: i32) -> (i32, i32, i32) {
    %c0_i32 = arith.constant 0 : i32
    %c0_i32_0 = arith.constant 0 : i32
    %c0_i32_1 = arith.constant 0 : i32
    return %arg0, %c0_i32, %c0_i32_0 : i32, i32, i32
  }
}

</mosaic_0001>

<llo_original>
// kernel: tpu_custom_call.1
$region0: #{tpu_custom_call.1}
  #allocation0 [shape = 'u32[]', space=smem, size = 0x4, offset = 0x4, fixed_abs, tag = 'smem constant byte address 0x4 - core index']
  #allocation1 [shape = 'u32[144,128]{1,0:T(1,128)}', space=vmem, size = 0x12000, scoped, tag = 'internal scratch']
  %s0 = inlined_call_operand.smem [shape: u32[39], index: -1, kind: input, shape index: {}]
  %s1 = sld [smem:[%s0]]
  %s2 = scalar_lea.smem %s0, 1
  %s3 = sld [smem:[%s2]]
  %s4 = scalar_lea.smem %s0, 2
  %s5 = sld [smem:[%s4]]
  %s6 = scalar_lea.smem %s0, 3
  %s7 = sld [smem:[%s6]]
  %s8 = scalar_lea.smem %s0, 4
  %s9 = sld [smem:[%s8]]
  %s10 = scalar_lea.smem %s0, 5
  %s11 = sld [smem:[%s10]]
  %s12 = scalar_lea.smem %s0, 6
  %s13 = sld [smem:[%s12]]
  %s14 = scalar_lea.smem %s0, 7
  %s15 = sld [smem:[%s14]]
  %s16 = scalar_lea.smem %s0, 8
  %s17 = sld [smem:[%s16]]
  %s18 = scalar_lea.smem %s0, 9
  %s19 = sld [smem:[%s18]]
  %s20 = scalar_lea.smem %s0, 10
  %s21 = sld [smem:[%s20]]
  %s22 = scalar_lea.smem %s0, 11
  %s23 = sld [smem:[%s22]]
  %s24 = scalar_lea.smem %s0, 12
  %s25 = sld [smem:[%s24]]
  %s26 = scalar_lea.smem %s0, 13
  %s27 = sld [smem:[%s26]]
  %s28 = scalar_lea.smem %s0, 14
  %s29 = sld [smem:[%s28]]
  %s30 = scalar_lea.smem %s0, 15
  %s31 = sld [smem:[%s30]]
  %s32 = scalar_lea.smem %s0, 16
  %s33 = sld [smem:[%s32]]
  %s34 = scalar_lea.smem %s0, 17
  %s35 = sld [smem:[%s34]]
  %s36 = scalar_lea.smem %s0, 18
  %s37 = sld [smem:[%s36]]
  %s38 = scalar_lea.smem %s0, 19
  %s39 = sld [smem:[%s38]]
  %s40 = scalar_lea.smem %s0, 20
  %s41 = sld [smem:[%s40]]
  %s42 = scalar_lea.smem %s0, 21
  %s43 = sld [smem:[%s42]]
  %s44 = scalar_lea.smem %s0, 22
  %s45 = sld [smem:[%s44]]
  %s46 = scalar_lea.smem %s0, 23
  %s47 = sld [smem:[%s46]]
  %s48 = scalar_lea.smem %s0, 24
  %s49 = sld [smem:[%s48]]
  %s50 = scalar_lea.smem %s0, 25
  %s51 = sld [smem:[%s50]]
  %s52 = scalar_lea.smem %s0, 26
  %s53 = sld [smem:[%s52]]
  %s54 = scalar_lea.smem %s0, 27
  %s55 = sld [smem:[%s54]]
  %s56 = scalar_lea.smem %s0, 28
  %s57 = sld [smem:[%s56]]
  %s58 = scalar_lea.smem %s0, 29
  %s59 = sld [smem:[%s58]]
  %s60 = scalar_lea.smem %s0, 30
  %s61 = sld [smem:[%s60]]
  %s62 = scalar_lea.smem %s0, 31
  %s63 = sld [smem:[%s62]]
  %s64 = scalar_lea.smem %s0, 32
  %s65 = sld [smem:[%s64]]
  %s66 = scalar_lea.smem %s0, 33
  %s67 = sld [smem:[%s66]]
  %s68 = scalar_lea.smem %s0, 34
  %s69 = sld [smem:[%s68]]
  %s70 = scalar_lea.smem %s0, 35
  %s71 = sld [smem:[%s70]]
  %s72 = scalar_lea.smem %s0, 36
  %s73 = sld [smem:[%s72]]
  %s74 = scalar_lea.smem %s0, 37
  %s75 = sld [smem:[%s74]]
  %s76 = scalar_lea.smem %s0, 38
  %s77 = sld [smem:[%s76]]
  %s78 = sld [smem:[#allocation0]]
  $region174: #{tpu_custom_call.1} parent=0
    _
  %s80 = ssub.s32 1, %s78
  %s81 = scalar_select 0, %s80, %s78
  $region1: #{tpu_custom_call.1} parent=0
    #allocation2 [shape = 'u8[512]{0}', space=vmem, size = 0x400, scoped, tag = 'input window, operand 4, single buffered']
    #allocation3 [shape = 's32[1]{0}', space=sflag, size = 0x4, scoped, tag = 'scoped memory for tpu_custom_call.1']
    #allocation4 [shape = 's32[1]{0}', space=sflag, size = 0x4, scoped, tag = 'scoped memory for tpu_custom_call.1']
    #allocation5 [shape = 'u8[512]{0}', space=vmem, size = 0x400, scoped, tag = 'input window, operand 5, single buffered']
    #allocation6 [shape = 's32[1]{0}', space=sflag, size = 0x4, scoped, tag = 'scoped memory for tpu_custom_call.1']
    #allocation7 [shape = 'u8[512]{0}', space=vmem, size = 0x400, scoped, tag = 'input window, operand 6, single buffered']
    #allocation8 [shape = 'u8[1024]{0}', space=vmem, size = 0x400, scoped, tag = 'output window, operand 0, single buffered']
    %82 = vsyncpa [#allocation3], 0
    %83 = vsyncpa [#allocation6], 0
    %84 = vsyncpa [#allocation4], 0
    // Predicated region
    $region2: #{tpu_custom_call.1} parent=1 // pred_check
      _
    $region3: #{tpu_custom_call.1} parent=1 // pred_check_branch
      %86 = sbr.rel (0) target = $region5
    $region4: #{tpu_custom_call.1} parent=1 // pred_region
      _
    $region5: #{tpu_custom_call.1} parent=1 // pred_fallthru
      _
    // Predicated region
    $region6: #{tpu_custom_call.1} parent=1 // pred_check
      _
    $region7: #{tpu_custom_call.1} parent=1 // pred_check_branch
      %88 = sbr.rel (0) target = $region9
    $region8: #{tpu_custom_call.1} parent=1 // pred_region
      _
    $region9: #{tpu_custom_call.1} parent=1 // pred_fallthru
      _
    // Predicated region
    $region10: #{tpu_custom_call.1} parent=1 // pred_check
      _
    $region11: #{tpu_custom_call.1} parent=1 // pred_check_branch
      %90 = sbr.rel (0) target = $region13
    $region12: #{tpu_custom_call.1} parent=1 // pred_region
      _
    $region13: #{tpu_custom_call.1} parent=1 // pred_fallthru
      _
    // Predicated region
    $region14: #{tpu_custom_call.1} parent=1 // pred_check
      _
    $region15: #{tpu_custom_call.1} parent=1 // pred_check_branch
      %92 = sbr.rel (0) target = $region17
    $region16: #{tpu_custom_call.1} parent=1 // pred_region
      _
    $region17: #{tpu_custom_call.1} parent=1 // pred_fallthru
      _
    // Predicated region
    $region18: #{tpu_custom_call.1} parent=1 // pred_check
      _
    $region19: #{tpu_custom_call.1} parent=1 // pred_check_branch
      %94 = sbr.rel (0) target = $region21
    $region20: #{tpu_custom_call.1} parent=1 // pred_region
      %s96 = ssub.s32 16, 16
      %97 = vsyncadd [#allocation3], %s96
      %s99 = sshll.u32 [#allocation2], 4
      %s100 = int_to_ptr.vmem [resolvable:$true] %s99
      %102 = dma.hbm_to_vmem [thread:$0]  %s9, 16, %s100, [#allocation3]
    $region21: #{tpu_custom_call.1} parent=1 // pred_fallthru
      _
    // Predicated region
    $region22: #{tpu_custom_call.1} parent=1 // pred_check
      _
    $region23: #{tpu_custom_call.1} parent=1 // pred_check_branch
      %104 = sbr.rel (0) target = $region25
    $region24: #{tpu_custom_call.1} parent=1 // pred_region
      %s106 = ssub.s32 16, 16
      %107 = vsyncadd [#allocation6], %s106
      %s109 = sshll.u32 [#allocation5], 4
      %s110 = int_to_ptr.vmem [resolvable:$true] %s109
      %112 = dma.hbm_to_vmem [thread:$0]  %s11, 16, %s110, [#allocation6]
    $region25: #{tpu_custom_call.1} parent=1 // pred_fallthru
      _
    // Predicated region
    $region26: #{tpu_custom_call.1} parent=1 // pred_check
      _
    $region27: #{tpu_custom_call.1} parent=1 // pred_check_branch
      %114 = sbr.rel (0) target = $region29
    $region28: #{tpu_custom_call.1} parent=1 // pred_region
      %s116 = ssub.s32 16, 16
      %117 = vsyncadd [#allocation6], %s116
      %s119 = sshll.u32 [#allocation7], 4
      %s120 = int_to_ptr.vmem [resolvable:$true] %s119
      %122 = dma.hbm_to_vmem [thread:$0]  %s13, 16, %s120, [#allocation6]
    $region29: #{tpu_custom_call.1} parent=1 // pred_fallthru
      _
    // Predicated region
    $region30: #{tpu_custom_call.1} parent=1 // pred_check
      _
    $region31: #{tpu_custom_call.1} parent=1 // pred_check_branch
      %124 = sbr.rel (0) target = $region33
    $region32: #{tpu_custom_call.1} parent=1 // pred_region
      _
    $region33: #{tpu_custom_call.1} parent=1 // pred_fallthru
      _
    // Predicated region
    $region34: #{tpu_custom_call.1} parent=1 // pred_check
      _
    $region35: #{tpu_custom_call.1} parent=1 // pred_check_branch
      %126 = sbr.rel (0) target = $region37
    $region36: #{tpu_custom_call.1} parent=1 // pred_region
      _
    $region37: #{tpu_custom_call.1} parent=1 // pred_fallthru
      _
    // Predicated region
    $region38: #{tpu_custom_call.1} parent=1 // pred_check
      _
    $region39: #{tpu_custom_call.1} parent=1 // pred_check_branch
      %128 = sbr.rel (0) target = $region41
    $region40: #{tpu_custom_call.1} parent=1 // pred_region
      _
    $region41: #{tpu_custom_call.1} parent=1 // pred_fallthru
      _
    // Predicated region
    $region42: #{tpu_custom_call.1} parent=1 // pred_check
      _
    $region43: #{tpu_custom_call.1} parent=1 // pred_check_branch
      %130 = sbr.rel (0) target = $region45
    $region44: #{tpu_custom_call.1} parent=1 // pred_region
      _
    $region45: #{tpu_custom_call.1} parent=1 // pred_fallthru
      _
    // Predicated region
    $region46: #{tpu_custom_call.1} parent=1 // pred_check
      _
    $region47: #{tpu_custom_call.1} parent=1 // pred_check_branch
      %132 = sbr.rel (0) target = $region49
    $region48: #{tpu_custom_call.1} parent=1 // pred_region
      _
    $region49: #{tpu_custom_call.1} parent=1 // pred_fallthru
      _
    // Predicated region
    $region50: #{tpu_custom_call.1} parent=1 // pred_check
      _
    $region51: #{tpu_custom_call.1} parent=1 // pred_check_branch
      %134 = sbr.rel (0) target = $region53
    $region52: #{tpu_custom_call.1} parent=1 // pred_region
      _
    $region53: #{tpu_custom_call.1} parent=1 // pred_fallthru
      _
    // Predicated region
    $region54: #{tpu_custom_call.1} parent=1 // pred_check
      _
    $region55: #{tpu_custom_call.1} parent=1 // pred_check_branch
      %136 = sbr.rel (0) target = $region57
    $region56: #{tpu_custom_call.1} parent=1 // pred_region
      _
    $region57: #{tpu_custom_call.1} parent=1 // pred_fallthru
      _
    // Predicated region
    $region58: #{tpu_custom_call.1} parent=1 // pred_check
      _
    $region59: #{tpu_custom_call.1} parent=1 // pred_check_branch
      %138 = sbr.rel (0) target = $region61
    $region60: #{tpu_custom_call.1} parent=1 // pred_region
      _
    $region61: #{tpu_custom_call.1} parent=1 // pred_fallthru
      _
    // Predicated region
    $region62: #{tpu_custom_call.1} parent=1 // pred_check
      _
    $region63: #{tpu_custom_call.1} parent=1 // pred_check_branch
      %140 = sbr.rel (0) target = $region65
    $region64: #{tpu_custom_call.1} parent=1 // pred_region
      _
    $region65: #{tpu_custom_call.1} parent=1 // pred_fallthru
      _
    // Predicated region
    $region66: #{tpu_custom_call.1} parent=1 // pred_check
      _
    $region67: #{tpu_custom_call.1} parent=1 // pred_check_branch
      %142 = sbr.rel (0) target = $region69
    $region68: #{tpu_custom_call.1} parent=1 // pred_region
      _
    $region69: #{tpu_custom_call.1} parent=1 // pred_fallthru
      _
    // Predicated region
    $region70: #{tpu_custom_call.1} parent=1 // pred_check
      _
    $region71: #{tpu_custom_call.1} parent=1 // pred_check_branch
      %144 = sbr.rel (0) target = $region73
    $region72: #{tpu_custom_call.1} parent=1 // pred_region
      _
    $region73: #{tpu_custom_call.1} parent=1 // pred_fallthru
      _
    // Predicated region
    $region74: #{tpu_custom_call.1} parent=1 // pred_check
      _
    $region75: #{tpu_custom_call.1} parent=1 // pred_check_branch
      %146 = sbr.rel (0) target = $region77
    $region76: #{tpu_custom_call.1} parent=1 // pred_region
      _
    $region77: #{tpu_custom_call.1} parent=1 // pred_fallthru
      _
    // Predicated region
    $region78: #{tpu_custom_call.1} parent=1 // pred_check
      _
    $region79: #{tpu_custom_call.1} parent=1 // pred_check_branch
      %148 = sbr.rel (0) target = $region81
    $region80: #{tpu_custom_call.1} parent=1 // pred_region
      _
    $region81: #{tpu_custom_call.1} parent=1 // pred_fallthru
      _
    // Predicated region
    $region82: #{tpu_custom_call.1} parent=1 // pred_check
      _
    $region83: #{tpu_custom_call.1} parent=1 // pred_check_branch
      %150 = sbr.rel (0) target = $region85
    $region84: #{tpu_custom_call.1} parent=1 // pred_region
      _
    $region85: #{tpu_custom_call.1} parent=1 // pred_fallthru
      _
    // Predicated region
    $region86: #{tpu_custom_call.1} parent=1 // pred_check
      _
    $region87: #{tpu_custom_call.1} parent=1 // pred_check_branch
      %152 = sbr.rel (0) target = $region89
    $region88: #{tpu_custom_call.1} parent=1 // pred_region
      _
    $region89: #{tpu_custom_call.1} parent=1 // pred_fallthru
      _
    // Predicated region
    $region90: #{tpu_custom_call.1} parent=1 // pred_check
      _
    $region91: #{tpu_custom_call.1} parent=1 // pred_check_branch
      %154 = sbr.rel (0) target = $region93
    $region92: #{tpu_custom_call.1} parent=1 // pred_region
      _
    $region93: #{tpu_custom_call.1} parent=1 // pred_fallthru
      _
    // Predicated region
    $region94: #{tpu_custom_call.1} parent=1 // pred_check
      _
    $region95: #{tpu_custom_call.1} parent=1 // pred_check_branch
      %156 = sbr.rel (0) target = $region97
    $region96: #{tpu_custom_call.1} parent=1 // pred_region
      _
    $region97: #{tpu_custom_call.1} parent=1 // pred_fallthru
      _
    // Predicated region
    $region98: #{tpu_custom_call.1} parent=1 // pred_check
      _
    $region99: #{tpu_custom_call.1} parent=1 // pred_check_branch
      %158 = sbr.rel (0) target = $region101
    $region100: #{tpu_custom_call.1} parent=1 // pred_region
      _
    $region101: #{tpu_custom_call.1} parent=1 // pred_fallthru
      _
    // Predicated region
    $region102: #{tpu_custom_call.1} parent=1 // pred_check
      _
    $region103: #{tpu_custom_call.1} parent=1 // pred_check_branch
      %160 = sbr.rel (0) target = $region105
    $region104: #{tpu_custom_call.1} parent=1 // pred_region
      _
    $region105: #{tpu_custom_call.1} parent=1 // pred_fallthru
      _
    // Predicated region
    $region106: #{tpu_custom_call.1} parent=1 // pred_check
      _
    $region107: #{tpu_custom_call.1} parent=1 // pred_check_branch
      %162 = sbr.rel (0) target = $region109
    $region108: #{tpu_custom_call.1} parent=1 // pred_region
      _
    $region109: #{tpu_custom_call.1} parent=1 // pred_fallthru
      _
    // Predicated region
    $region110: #{tpu_custom_call.1} parent=1 // pred_check
      _
    $region111: #{tpu_custom_call.1} parent=1 // pred_check_branch
      %164 = sbr.rel (0) target = $region113
    $region112: #{tpu_custom_call.1} parent=1 // pred_region
      _
    $region113: #{tpu_custom_call.1} parent=1 // pred_fallthru
      _
    // Predicated region
    $region114: #{tpu_custom_call.1} parent=1 // pred_check
      _
    $region115: #{tpu_custom_call.1} parent=1 // pred_check_branch
      %166 = sbr.rel (0) target = $region117
    $region116: #{tpu_custom_call.1} parent=1 // pred_region
      _
    $region117: #{tpu_custom_call.1} parent=1 // pred_fallthru
      _
    // Predicated region
    $region118: #{tpu_custom_call.1} parent=1 // pred_check
      _
    $region119: #{tpu_custom_call.1} parent=1 // pred_check_branch
      %168 = sbr.rel (0) target = $region121
    $region120: #{tpu_custom_call.1} parent=1 // pred_region
      _
    $region121: #{tpu_custom_call.1} parent=1 // pred_fallthru
      _
    // Predicated region
    $region122: #{tpu_custom_call.1} parent=1 // pred_check
      _
    $region123: #{tpu_custom_call.1} parent=1 // pred_check_branch
      %170 = sbr.rel (0) target = $region125
    $region124: #{tpu_custom_call.1} parent=1 // pred_region
      _
    $region125: #{tpu_custom_call.1} parent=1 // pred_fallthru
      _
    // Predicated region
    $region126: #{tpu_custom_call.1} parent=1 // pred_check
      _
    $region127: #{tpu_custom_call.1} parent=1 // pred_check_branch
      %172 = sbr.rel (0) target = $region129
    $region128: #{tpu_custom_call.1} parent=1 // pred_region
      _
    $region129: #{tpu_custom_call.1} parent=1 // pred_fallthru
      _
    // Predicated region
    $region130: #{tpu_custom_call.1} parent=1 // pred_check
      _
    $region131: #{tpu_custom_call.1} parent=1 // pred_check_branch
      %174 = sbr.rel (0) target = $region133
    $region132: #{tpu_custom_call.1} parent=1 // pred_region
      _
    $region133: #{tpu_custom_call.1} parent=1 // pred_fallthru
      _
    // Predicated region
    $region134: #{tpu_custom_call.1} parent=1 // pred_check
      _
    $region135: #{tpu_custom_call.1} parent=1 // pred_check_branch
      %176 = sbr.rel (0) target = $region137
    $region136: #{tpu_custom_call.1} parent=1 // pred_region
      _
    $region137: #{tpu_custom_call.1} parent=1 // pred_fallthru
      _
    // Predicated region
    $region138: #{tpu_custom_call.1} parent=1 // pred_check
      _
    $region139: #{tpu_custom_call.1} parent=1 // pred_check_branch
      %178 = sbr.rel (0) target = $region141
    $region140: #{tpu_custom_call.1} parent=1 // pred_region
      _
    $region141: #{tpu_custom_call.1} parent=1 // pred_fallthru
      _
    // Predicated region
    $region142: #{tpu_custom_call.1} parent=1 // pred_check
      _
    $region143: #{tpu_custom_call.1} parent=1 // pred_check_branch
      %180 = sbr.rel (0) target = $region145
    $region144: #{tpu_custom_call.1} parent=1 // pred_region
      _
    $region145: #{tpu_custom_call.1} parent=1 // pred_fallthru
      _
    // Predicated region
    $region146: #{tpu_custom_call.1} parent=1 // pred_check
      _
    $region147: #{tpu_custom_call.1} parent=1 // pred_check_branch
      %182 = sbr.rel (0) target = $region149
    $region148: #{tpu_custom_call.1} parent=1 // pred_region
      _
    $region149: #{tpu_custom_call.1} parent=1 // pred_fallthru
      _
    // Predicated region
    $region150: #{tpu_custom_call.1} parent=1 // pred_check
      _
    $region151: #{tpu_custom_call.1} parent=1 // pred_check_branch
      %184 = sbr.rel (0) target = $region153
    $region152: #{tpu_custom_call.1} parent=1 // pred_region
      _
    $region153: #{tpu_custom_call.1} parent=1 // pred_fallthru
      _
    // Predicated region
    $region154: #{tpu_custom_call.1} parent=1 // pred_check
      _
    $region155: #{tpu_custom_call.1} parent=1 // pred_check_branch
      %186 = sbr.rel (0) target = $region157
    $region156: #{tpu_custom_call.1} parent=1 // pred_region
      %187 = dma.done [#allocation3], 16
    $region157: #{tpu_custom_call.1} parent=1 // pred_fallthru
      _
    // Predicated region
    $region158: #{tpu_custom_call.1} parent=1 // pred_check
      _
    $region159: #{tpu_custom_call.1} parent=1 // pred_check_branch
      %189 = sbr.rel (0) target = $region161
    $region160: #{tpu_custom_call.1} parent=1 // pred_region
      %190 = dma.done [#allocation6], 16
    $region161: #{tpu_custom_call.1} parent=1 // pred_fallthru
      _
    // Predicated region
    $region162: #{tpu_custom_call.1} parent=1 // pred_check
      _
    $region163: #{tpu_custom_call.1} parent=1 // pred_check_branch
      %192 = sbr.rel (0) target = $region165
    $region164: #{tpu_custom_call.1} parent=1 // pred_region
      %193 = dma.done [#allocation6], 16
    $region165: #{tpu_custom_call.1} parent=1 // pred_fallthru
      _
    %v194 = vld [vmem:[%s3] sm:$0xff]
    %v195 = vld [vmem:[%s3 + $0x8] sm:$0xff]
    %v196 = vld [vmem:[%s1] sm:$0xff]
    %v197 = vld [vmem:[%s1 + $0x8] sm:$0xff]
    %v198 = vld [vmem:[%s5] sm:$0x1]
    %200 = vset.pattern.permute.xlu0 0
    %201 = vperm.xlu0 %200, %v196
    %v202 = vpop.permute.xlu0 %201
    %205 = vset.pattern.permute.xlu0 0
    %206 = vperm.xlu0 %205, %v197
    %v207 = vpop.permute.xlu0 %206
    %v210 = vlaneseq
    %v211 = vshrl.u32 %v210, 7
    %v212 = vsub.s32 0, %v211
    %v213 = vrot.slane %v198, %v212
    %v215 = vmul.f32 %v202, %v213
    %v216 = vmul.f32 %v207, %v213
    %v217 = vld [vmem:[%s7] sm:$0x1]
    %218 = vset.pattern.permute.xlu0 1
    %219 = vperm.xlu0 %218, %v196
    %v220 = vpop.permute.xlu0 %219
    %222 = vset.pattern.permute.xlu0 1
    %223 = vperm.xlu0 %222, %v197
    %v224 = vpop.permute.xlu0 %223
    %v227 = vlaneseq
    %v228 = vshrl.u32 %v227, 7
    %v229 = vsub.s32 0, %v228
    %v230 = vrot.slane %v217, %v229
    %v232 = vmul.f32 %v220, %v230
    %v233 = vmul.f32 %v224, %v230
    %v234 = vadd.f32 %v215, %v232
    %v235 = vadd.f32 %v216, %v233
    %v236 = vld [vmem:[#allocation2] sm:$0x1]
    %v238 = vlaneseq
    %v239 = vshrl.u32 %v238, 7
    %v240 = vsub.s32 0, %v239
    %v241 = vrot.slane %v236, %v240
    %v243 = vadd.f32 %v234, %v241
    %v244 = vadd.f32 %v235, %v241
    %v245 = vld [vmem:[#allocation5] sm:$0x1]
    %v246 = vld [vmem:[#allocation7] sm:$0x1]
    %vm247 = vcmask 130048
    %v248 = vsel %vm247, %v243, 0.0
    %249 = vadd.xlane.f32.xlu0 %v248
    %v250 = vpop.xlane.xlu0 %249
    %v251 = vsel %vm247, %v244, 0.0
    %252 = vadd.xlane.f32.xlu0 %v251
    %v253 = vpop.xlane.xlu0 %252
    %v254 = vrcp.pop 16.0
    %v255 = vmul.f32 %v250, %v254
    %v256 = vmul.f32 %v253, %v254
    %v257 = vsub.f32 %v243, %v255
    %v258 = vsub.f32 %v244, %v256
    %v259 = vmul.f32 %v257, %v257
    %v260 = vmul.f32 %v258, %v258
    %v261 = vsel %vm247, %v259, 0.0
    %262 = vadd.xlane.f32.xlu0 %v261
    %v263 = vpop.xlane.xlu0 %262
    %v264 = vsel %vm247, %v260, 0.0
    %265 = vadd.xlane.f32.xlu0 %v264
    %v266 = vpop.xlane.xlu0 %265
    %v267 = vmul.f32 %v263, %v254
    %v268 = vmul.f32 %v266, %v254
    %v269 = vadd.f32 %v267, 1e-05
    %v270 = vadd.f32 %v268, 1e-05
    %v271 = vrsqrt.pop %v269
    %v272 = vrsqrt.pop %v270
    %v273 = vmul.f32 %v257, %v271
    %v274 = vmul.f32 %v258, %v272
    %v276 = vlaneseq
    %v277 = vshrl.u32 %v276, 7
    %v278 = vsub.s32 0, %v277
    %v279 = vrot.slane %v245, %v278
    %v281 = vmul.f32 %v273, %v279
    %v282 = vmul.f32 %v274, %v279
    %v284 = vlaneseq
    %v285 = vshrl.u32 %v284, 7
    %v286 = vsub.s32 0, %v285
    %v287 = vrot.slane %v246, %v286
    %v289 = vadd.f32 %v281, %v287
    %v290 = vadd.f32 %v282, %v287
    %v291 = vtanh.pop %v289
    %v292 = vtanh.pop %v290
    %v293 = vld [vmem:[%s15] sm:$0xff]
    %v294 = vld [vmem:[%s15 + $0x8] sm:$0xff]
    %v295 = vld [vmem:[%s17] sm:$0x1]
    %v297 = vlaneseq
    %v298 = vshrl.u32 %v297, 7
    %v299 = vsub.s32 0, %v298
    %v300 = vrot.slane %v295, %v299
    %v303 = vsel %vm247, %v291, 0
    %v306 = vsel %vm247, %v292, 0
    %308 = vmatprep.subr.mxu0 0.0
    %309 = vmatpush1.msra.mxu0 %v293
    %310 = vmatprep.subr.mxu0 0.0
    %311 = vmatpush1.msra.mxu0 %v294
    %312 = vmatprep.subr.mxu0 0.0
    %313 = vmatpush1.msra.mxu0 0.0
    %314 = vmatprep.subr.mxu0 0.0
    %315 = vmatpush1.msra.mxu0 0.0
    %316 = vmatprep.subr.mxu0 0.0
    %317 = vmatpush1.msra.mxu0 0.0
    %318 = vmatprep.subr.mxu0 0.0
    %319 = vmatpush1.msra.mxu0 0.0
    %320 = vmatprep.subr.mxu0 0.0
    %321 = vmatpush1.msra.mxu0 0.0
    %322 = vmatprep.subr.mxu0 0.0
    %323 = vmatpush1.msra.mxu0 0.0
    %324 = vmatprep.subr.mxu0 0.0
    %325 = vmatpush1.msra.mxu0 0.0
    %326 = vmatprep.subr.mxu0 0.0
    %327 = vmatpush1.msra.mxu0 0.0
    %328 = vmatprep.subr.mxu0 0.0
    %329 = vmatpush1.msra.mxu0 0.0
    %330 = vmatprep.subr.mxu0 0.0
    %331 = vmatpush1.msra.mxu0 0.0
    %332 = vmatprep.subr.mxu0 0.0
    %333 = vmatpush1.msra.mxu0 0.0
    %334 = vmatprep.subr.mxu0 0.0
    %335 = vmatpush1.msra.mxu0 0.0
    %336 = vmatprep.subr.mxu0 0.0
    %337 = vmatpush1.msra.mxu0 0.0
    %338 = vmatprep.subr.mxu0 0.0
    %339 = vmatpush1.msra.mxu0 0.0
    %340 = vmatprep.subr.mxu0 0.0
    %341 = vmatpush1.msra.mxu0 0.0
    %342 = vmatprep.subr.mxu0 0.0
    %343 = vmatpush1.msra.mxu0 0.0
    %344 = vmatprep.subr.mxu0 0.0
    %345 = vmatpush1.msra.mxu0 0.0
    %346 = vmatprep.subr.mxu0 0.0
    %347 = vmatpush1.msra.mxu0 0.0
    %348 = vmatprep.subr.mxu0 0.0
    %349 = vmatpush1.msra.mxu0 0.0
    %350 = vmatprep.subr.mxu0 0.0
    %351 = vmatpush1.msra.mxu0 0.0
    %352 = vmatprep.subr.mxu0 0.0
    %353 = vmatpush1.msra.mxu0 0.0
    %354 = vmatprep.subr.mxu0 0.0
    %355 = vmatpush1.msra.mxu0 0.0
    %356 = vmatprep.subr.mxu0 0.0
    %357 = vmatpush1.msra.mxu0 0.0
    %358 = vmatprep.subr.mxu0 0.0
    %359 = vmatpush1.msra.mxu0 0.0
    %360 = vmatprep.subr.mxu0 0.0
    %361 = vmatpush1.msra.mxu0 0.0
    %362 = vmatprep.subr.mxu0 0.0
    %363 = vmatpush1.msra.mxu0 0.0
    %364 = vmatprep.subr.mxu0 0.0
    %365 = vmatpush1.msra.mxu0 0.0
    %366 = vmatprep.subr.mxu0 0.0
    %367 = vmatpush1.msra.mxu0 0.0
    %368 = vmatprep.subr.mxu0 0.0
    %369 = vmatpush1.msra.mxu0 0.0
    %370 = vmatprep.subr.mxu0 0.0
    %371 = vmatpush1.msra.mxu0 0.0
    %372 = vmatprep.mubr.f32.mxu0 0.0
    %373 = vmatmul.mubr.f32.gmra.mrb[0].mxu0 %v303
    %v374 = vpop.f32.mrb[0].mxu0
    %v375 = vadd.f32 %v300, %v374
    %v376 = vpop.f32.mrb[0].mxu0
    %377 = vmatprep.mubr.f32.mxu0 0.0
    %378 = vmatmul.mubr.f32.gmra.mrb[0].mxu0 %v306
    %v379 = vpop.f32.mrb[0].mxu0
    %v380 = vadd.f32 %v300, %v379
    %v381 = vpop.f32.mrb[0].mxu0
    %382 = vdwg.mxu0
    %v383 = vld [vmem:[%s19] sm:$0x1]
    %v384 = vld [vmem:[%s21] sm:$0x1]
    %vm385 = vcmask 261120
    %v386 = vsel %vm385, %v375, 0.0
    %387 = vadd.xlane.f32.xlu0 %v386
    %v388 = vpop.xlane.xlu0 %387
    %v389 = vsel %vm385, %v380, 0.0
    %390 = vadd.xlane.f32.xlu0 %v389
    %v391 = vpop.xlane.xlu0 %390
    %v392 = vrcp.pop 32.0
    %v393 = vmul.f32 %v388, %v392
    %v394 = vmul.f32 %v391, %v392
    %v395 = vsub.f32 %v375, %v393
    %v396 = vsub.f32 %v380, %v394
    %v397 = vmul.f32 %v395, %v395
    %v398 = vmul.f32 %v396, %v396
    %v399 = vsel %vm385, %v397, 0.0
    %400 = vadd.xlane.f32.xlu0 %v399
    %v401 = vpop.xlane.xlu0 %400
    %v402 = vsel %vm385, %v398, 0.0
    %403 = vadd.xlane.f32.xlu0 %v402
    %v404 = vpop.xlane.xlu0 %403
    %v405 = vmul.f32 %v401, %v392
    %v406 = vmul.f32 %v404, %v392
    %v407 = vadd.f32 %v405, 1e-05
    %v408 = vadd.f32 %v406, 1e-05
    %v409 = vrsqrt.pop %v407
    %v410 = vrsqrt.pop %v408
    %v411 = vmul.f32 %v395, %v409
    %v412 = vmul.f32 %v396, %v410
    %v414 = vlaneseq
    %v415 = vshrl.u32 %v414, 7
    %v416 = vsub.s32 0, %v415
    %v417 = vrot.slane %v383, %v416
    %v419 = vmul.f32 %v411, %v417
    %v420 = vmul.f32 %v412, %v417
    %v422 = vlaneseq
    %v423 = vshrl.u32 %v422, 7
    %v424 = vsub.s32 0, %v423
    %v425 = vrot.slane %v384, %v424
    %v427 = vadd.f32 %v419, %v425
    %v428 = vadd.f32 %v420, %v425
    %v429 = vld [vmem:[%s23] sm:$0x1]
    %v430 = vld [vmem:[%s25] sm:$0x1]
    %v431 = vsel %vm385, %v194, 0.0
    %432 = vadd.xlane.f32.xlu0 %v431
    %v433 = vpop.xlane.xlu0 %432
    %v434 = vsel %vm385, %v195, 0.0
    %435 = vadd.xlane.f32.xlu0 %v434
    %v436 = vpop.xlane.xlu0 %435
    %v437 = vmul.f32 %v433, %v392
    %v438 = vmul.f32 %v436, %v392
    %v439 = vsub.f32 %v194, %v437
    %v440 = vsub.f32 %v195, %v438
    %v441 = vmul.f32 %v439, %v439
    %v442 = vmul.f32 %v440, %v440
    %v443 = vsel %vm385, %v441, 0.0
    %444 = vadd.xlane.f32.xlu0 %v443
    %v445 = vpop.xlane.xlu0 %444
    %v446 = vsel %vm385, %v442, 0.0
    %447 = vadd.xlane.f32.xlu0 %v446
    %v448 = vpop.xlane.xlu0 %447
    %v449 = vmul.f32 %v445, %v392
    %v450 = vmul.f32 %v448, %v392
    %v451 = vadd.f32 %v449, 1e-05
    %v452 = vadd.f32 %v450, 1e-05
    %v453 = vrsqrt.pop %v451
    %v454 = vrsqrt.pop %v452
    %v455 = vmul.f32 %v439, %v453
    %v456 = vmul.f32 %v440, %v454
    %v458 = vlaneseq
    %v459 = vshrl.u32 %v458, 7
    %v460 = vsub.s32 0, %v459
    %v461 = vrot.slane %v429, %v460
    %v463 = vmul.f32 %v455, %v461
    %v464 = vmul.f32 %v456, %v461
    %v466 = vlaneseq
    %v467 = vshrl.u32 %v466, 7
    %v468 = vsub.s32 0, %v467
    %v469 = vrot.slane %v430, %v468
    %v471 = vadd.f32 %v463, %v469
    %v472 = vadd.f32 %v464, %v469
    %v473 = vadd.f32 %v471, %v427
    %v474 = vadd.f32 %v472, %v428
    %v475 = vld [vmem:[%s27] sm:$0xff]
    %v476 = vld [vmem:[%s27 + $0x8] sm:$0xff]
    %v477 = vld [vmem:[%s27 + $0x10] sm:$0xff]
    %v478 = vld [vmem:[%s27 + $0x18] sm:$0xff]
    %v479 = vld [vmem:[%s29] sm:$0x1]
    %v481 = vlaneseq
    %v482 = vshrl.u32 %v481, 7
    %v483 = vsub.s32 0, %v482
    %v484 = vrot.slane %v479, %v483
    %v488 = vrot.slane %v473, 4
    %v489 = vrot.slane %v474, 3
    %vm490 = vcmask 1041409
    %v491 = vsel %vm490, %v489, %v488
    %v492 = vsel %vm385, %v491, 0
    %494 = vmatprep.subr.mxu0 0.0
    %495 = vmatpush1.msra.mxu0 %v475
    %496 = vmatprep.subr.mxu0 0.0
    %497 = vmatpush1.msra.mxu0 %v476
    %498 = vmatprep.subr.mxu0 0.0
    %499 = vmatpush1.msra.mxu0 %v477
    %500 = vmatprep.subr.mxu0 0.0
    %501 = vmatpush1.msra.mxu0 %v478
    %502 = vmatprep.subr.mxu0 0.0
    %503 = vmatpush1.msra.mxu0 0.0
    %504 = vmatprep.subr.mxu0 0.0
    %505 = vmatpush1.msra.mxu0 0.0
    %506 = vmatprep.subr.mxu0 0.0
    %507 = vmatpush1.msra.mxu0 0.0
    %508 = vmatprep.subr.mxu0 0.0
    %509 = vmatpush1.msra.mxu0 0.0
    %510 = vmatprep.subr.mxu0 0.0
    %511 = vmatpush1.msra.mxu0 0.0
    %512 = vmatprep.subr.mxu0 0.0
    %513 = vmatpush1.msra.mxu0 0.0
    %514 = vmatprep.subr.mxu0 0.0
    %515 = vmatpush1.msra.mxu0 0.0
    %516 = vmatprep.subr.mxu0 0.0
    %517 = vmatpush1.msra.mxu0 0.0
    %518 = vmatprep.subr.mxu0 0.0
    %519 = vmatpush1.msra.mxu0 0.0
    %520 = vmatprep.subr.mxu0 0.0
    %521 = vmatpush1.msra.mxu0 0.0
    %522 = vmatprep.subr.mxu0 0.0
    %523 = vmatpush1.msra.mxu0 0.0
    %524 = vmatprep.subr.mxu0 0.0
    %525 = vmatpush1.msra.mxu0 0.0
    %526 = vmatprep.subr.mxu0 0.0
    %527 = vmatpush1.msra.mxu0 0.0
    %528 = vmatprep.subr.mxu0 0.0
    %529 = vmatpush1.msra.mxu0 0.0
    %530 = vmatprep.subr.mxu0 0.0
    %531 = vmatpush1.msra.mxu0 0.0
    %532 = vmatprep.subr.mxu0 0.0
    %533 = vmatpush1.msra.mxu0 0.0
    %534 = vmatprep.subr.mxu0 0.0
    %535 = vmatpush1.msra.mxu0 0.0
    %536 = vmatprep.subr.mxu0 0.0
    %537 = vmatpush1.msra.mxu0 0.0
    %538 = vmatprep.subr.mxu0 0.0
    %539 = vmatpush1.msra.mxu0 0.0
    %540 = vmatprep.subr.mxu0 0.0
    %541 = vmatpush1.msra.mxu0 0.0
    %542 = vmatprep.subr.mxu0 0.0
    %543 = vmatpush1.msra.mxu0 0.0
    %544 = vmatprep.subr.mxu0 0.0
    %545 = vmatpush1.msra.mxu0 0.0
    %546 = vmatprep.subr.mxu0 0.0
    %547 = vmatpush1.msra.mxu0 0.0
    %548 = vmatprep.subr.mxu0 0.0
    %549 = vmatpush1.msra.mxu0 0.0
    %550 = vmatprep.subr.mxu0 0.0
    %551 = vmatpush1.msra.mxu0 0.0
    %552 = vmatprep.subr.mxu0 0.0
    %553 = vmatpush1.msra.mxu0 0.0
    %554 = vmatprep.subr.mxu0 0.0
    %555 = vmatpush1.msra.mxu0 0.0
    %556 = vmatprep.subr.mxu0 0.0
    %557 = vmatpush1.msra.mxu0 0.0
    %558 = vmatprep.mubr.f32.mxu0 0.0
    %559 = vmatmul.mubr.f32.gmra.mrb[0].mxu0 %v492
    %v560 = vpop.f32.mrb[0].mxu0
    %v561 = vadd.f32 %v484, %v560
    %v562 = vpop.f32.mrb[0].mxu0
    %563 = vdwg.mxu0
    %v564 = vmul.f32 %v561, 0.35355327
    %v565 = vld [vmem:[%s31] sm:$0xff]
    %v566 = vld [vmem:[%s31 + $0x8] sm:$0xff]
    %v567 = vld [vmem:[%s31 + $0x10] sm:$0xff]
    %v568 = vld [vmem:[%s31 + $0x18] sm:$0xff]
    %v569 = vld [vmem:[%s33] sm:$0x1]
    %v571 = vlaneseq
    %v572 = vshrl.u32 %v571, 7
    %v573 = vsub.s32 0, %v572
    %v574 = vrot.slane %v569, %v573
    %v576 = vsel %vm385, %v473, 0
    %v578 = vsel %vm385, %v474, 0
    %580 = vmatprep.subr.mxu0 0.0
    %581 = vmatpush1.msra.mxu0 %v565
    %582 = vmatprep.subr.mxu0 0.0
    %583 = vmatpush1.msra.mxu0 %v566
    %584 = vmatprep.subr.mxu0 0.0
    %585 = vmatpush1.msra.mxu0 %v567
    %586 = vmatprep.subr.mxu0 0.0
    %587 = vmatpush1.msra.mxu0 %v568
    %588 = vmatprep.subr.mxu0 0.0
    %589 = vmatpush1.msra.mxu0 0.0
    %590 = vmatprep.subr.mxu0 0.0
    %591 = vmatpush1.msra.mxu0 0.0
    %592 = vmatprep.subr.mxu0 0.0
    %593 = vmatpush1.msra.mxu0 0.0
    %594 = vmatprep.subr.mxu0 0.0
    %595 = vmatpush1.msra.mxu0 0.0
    %596 = vmatprep.subr.mxu0 0.0
    %597 = vmatpush1.msra.mxu0 0.0
    %598 = vmatprep.subr.mxu0 0.0
    %599 = vmatpush1.msra.mxu0 0.0
    %600 = vmatprep.subr.mxu0 0.0
    %601 = vmatpush1.msra.mxu0 0.0
    %602 = vmatprep.subr.mxu0 0.0
    %603 = vmatpush1.msra.mxu0 0.0
    %604 = vmatprep.subr.mxu0 0.0
    %605 = vmatpush1.msra.mxu0 0.0
    %606 = vmatprep.subr.mxu0 0.0
    %607 = vmatpush1.msra.mxu0 0.0
    %608 = vmatprep.subr.mxu0 0.0
    %609 = vmatpush1.msra.mxu0 0.0
    %610 = vmatprep.subr.mxu0 0.0
    %611 = vmatpush1.msra.mxu0 0.0
    %612 = vmatprep.subr.mxu0 0.0
    %613 = vmatpush1.msra.mxu0 0.0
    %614 = vmatprep.subr.mxu0 0.0
    %615 = vmatpush1.msra.mxu0 0.0
    %616 = vmatprep.subr.mxu0 0.0
    %617 = vmatpush1.msra.mxu0 0.0
    %618 = vmatprep.subr.mxu0 0.0
    %619 = vmatpush1.msra.mxu0 0.0
    %620 = vmatprep.subr.mxu0 0.0
    %621 = vmatpush1.msra.mxu0 0.0
    %622 = vmatprep.subr.mxu0 0.0
    %623 = vmatpush1.msra.mxu0 0.0
    %624 = vmatprep.subr.mxu0 0.0
    %625 = vmatpush1.msra.mxu0 0.0
    %626 = vmatprep.subr.mxu0 0.0
    %627 = vmatpush1.msra.mxu0 0.0
    %628 = vmatprep.subr.mxu0 0.0
    %629 = vmatpush1.msra.mxu0 0.0
    %630 = vmatprep.subr.mxu0 0.0
    %631 = vmatpush1.msra.mxu0 0.0
    %632 = vmatprep.subr.mxu0 0.0
    %633 = vmatpush1.msra.mxu0 0.0
    %634 = vmatprep.subr.mxu0 0.0
    %635 = vmatpush1.msra.mxu0 0.0
    %636 = vmatprep.subr.mxu0 0.0
    %637 = vmatpush1.msra.mxu0 0.0
    %638 = vmatprep.subr.mxu0 0.0
    %639 = vmatpush1.msra.mxu0 0.0
    %640 = vmatprep.subr.mxu0 0.0
    %641 = vmatpush1.msra.mxu0 0.0
    %642 = vmatprep.subr.mxu0 0.0
    %643 = vmatpush1.msra.mxu0 0.0
    %644 = vmatprep.mubr.f32.mxu0 0.0
    %645 = vmatmul.mubr.f32.gmra.mrb[0].mxu0 %v576
    %v646 = vpop.f32.mrb[0].mxu0
    %v647 = vadd.f32 %v574, %v646
    %v648 = vpop.f32.mrb[0].mxu0
    %649 = vmatprep.mubr.f32.mxu0 0.0
    %650 = vmatmul.mubr.f32.gmra.mrb[0].mxu0 %v578
    %v651 = vpop.f32.mrb[0].mxu0
    %v652 = vadd.f32 %v574, %v651
    %v653 = vpop.f32.mrb[0].mxu0
    %654 = vdwg.mxu0
    %v655 = vld [vmem:[%s35] sm:$0xff]
    %v656 = vld [vmem:[%s35 + $0x8] sm:$0xff]
    %v657 = vld [vmem:[%s35 + $0x10] sm:$0xff]
    %v658 = vld [vmem:[%s35 + $0x18] sm:$0xff]
    %v659 = vld [vmem:[%s37] sm:$0x1]
    %v661 = vlaneseq
    %v662 = vshrl.u32 %v661, 7
    %v663 = vsub.s32 0, %v662
    %v664 = vrot.slane %v659, %v663
    %666 = vmatprep.subr.mxu0 0.0
    %667 = vmatpush1.msra.mxu0 %v655
    %668 = vmatprep.subr.mxu0 0.0
    %669 = vmatpush1.msra.mxu0 %v656
    %670 = vmatprep.subr.mxu0 0.0
    %671 = vmatpush1.msra.mxu0 %v657
    %672 = vmatprep.subr.mxu0 0.0
    %673 = vmatpush1.msra.mxu0 %v658
    %674 = vmatprep.subr.mxu0 0.0
    %675 = vmatpush1.msra.mxu0 0.0
    %676 = vmatprep.subr.mxu0 0.0
    %677 = vmatpush1.msra.mxu0 0.0
    %678 = vmatprep.subr.mxu0 0.0
    %679 = vmatpush1.msra.mxu0 0.0
    %680 = vmatprep.subr.mxu0 0.0
    %681 = vmatpush1.msra.mxu0 0.0
    %682 = vmatprep.subr.mxu0 0.0
    %683 = vmatpush1.msra.mxu0 0.0
    %684 = vmatprep.subr.mxu0 0.0
    %685 = vmatpush1.msra.mxu0 0.0
    %686 = vmatprep.subr.mxu0 0.0
    %687 = vmatpush1.msra.mxu0 0.0
    %688 = vmatprep.subr.mxu0 0.0
    %689 = vmatpush1.msra.mxu0 0.0
    %690 = vmatprep.subr.mxu0 0.0
    %691 = vmatpush1.msra.mxu0 0.0
    %692 = vmatprep.subr.mxu0 0.0
    %693 = vmatpush1.msra.mxu0 0.0
    %694 = vmatprep.subr.mxu0 0.0
    %695 = vmatpush1.msra.mxu0 0.0
    %696 = vmatprep.subr.mxu0 0.0
    %697 = vmatpush1.msra.mxu0 0.0
    %698 = vmatprep.subr.mxu0 0.0
    %699 = vmatpush1.msra.mxu0 0.0
    %700 = vmatprep.subr.mxu0 0.0
    %701 = vmatpush1.msra.mxu0 0.0
    %702 = vmatprep.subr.mxu0 0.0
    %703 = vmatpush1.msra.mxu0 0.0
    %704 = vmatprep.subr.mxu0 0.0
    %705 = vmatpush1.msra.mxu0 0.0
    %706 = vmatprep.subr.mxu0 0.0
    %707 = vmatpush1.msra.mxu0 0.0
    %708 = vmatprep.subr.mxu0 0.0
    %709 = vmatpush1.msra.mxu0 0.0
    %710 = vmatprep.subr.mxu0 0.0
    %711 = vmatpush1.msra.mxu0 0.0
    %712 = vmatprep.subr.mxu0 0.0
    %713 = vmatpush1.msra.mxu0 0.0
    %714 = vmatprep.subr.mxu0 0.0
    %715 = vmatpush1.msra.mxu0 0.0
    %716 = vmatprep.subr.mxu0 0.0
    %717 = vmatpush1.msra.mxu0 0.0
    %718 = vmatprep.subr.mxu0 0.0
    %719 = vmatpush1.msra.mxu0 0.0
    %720 = vmatprep.subr.mxu0 0.0
    %721 = vmatpush1.msra.mxu0 0.0
    %722 = vmatprep.subr.mxu0 0.0
    %723 = vmatpush1.msra.mxu0 0.0
    %724 = vmatprep.subr.mxu0 0.0
    %725 = vmatpush1.msra.mxu0 0.0
    %726 = vmatprep.subr.mxu0 0.0
    %727 = vmatpush1.msra.mxu0 0.0
    %728 = vmatprep.subr.mxu0 0.0
    %729 = vmatpush1.msra.mxu0 0.0
    %730 = vmatprep.mubr.f32.mxu0 0.0
    %731 = vmatmul.mubr.f32.gmra.mrb[0].mxu0 %v576
    %v732 = vpop.f32.mrb[0].mxu0
    %v733 = vadd.f32 %v664, %v732
    %v734 = vpop.f32.mrb[0].mxu0
    %735 = vmatprep.mubr.f32.mxu0 0.0
    %736 = vmatmul.mubr.f32.gmra.mrb[0].mxu0 %v578
    %v737 = vpop.f32.mrb[0].mxu0
    %v738 = vadd.f32 %v664, %v737
    %v739 = vpop.f32.mrb[0].mxu0
    %740 = vdwg.mxu0
    %v743 = vunpack.c.l.s4 1966171168
    %v744 = vunpack.c.0.s8 %v743
    %v745 = vlaneseq
    %v746 = vshrl.u32 %v745, 7
    %v747 = vsub.s32 %v744, %v746
    %v748 = vrot.slane %v564, %v747
    %v749 = vcombine.high %v748, %v748
    %v751 = vunpack.c.l.s4 1966171168
    %v752 = vunpack.c.0.s8 %v751
    %v753 = vlaneseq
    %v754 = vshrl.u32 %v753, 7
    %v755 = vsub.s32 %v752, %v754
    %v756 = vrot.slane %v748, %v755
    %v758 = vunpack.c.l.s4 1966171168
    %v759 = vunpack.c.0.s8 %v758
    %v760 = vlaneseq
    %v761 = vshrl.u32 %v760, 7
    %v762 = vsub.s32 %v759, %v761
    %v763 = vrot.slane %v749, %v762
    %v764 = vlaneseq
    %v765 = vshrl.u32 %v764, 7
    %v766 = vsub.s32 0, %v765
    %v767 = vrot.slane %v756, %v766
    %v768 = vlaneseq
    %v769 = vshrl.u32 %v768, 7
    %v770 = vsub.s32 0, %v769
    %v771 = vrot.slane %v763, %v770
    %v774 = vmul.f32 %v647, %v767
    %v775 = vmul.f32 %v652, %v771
    %v776 = vld [vmem:[%s45] sm:$0xff]
    %v777 = vld [vmem:[%s45 + $0x8] sm:$0xff]
    %v778 = vld [vmem:[%s45 + $0x10] sm:$0xff]
    %v779 = vld [vmem:[%s45 + $0x18] sm:$0xff]
    %v781 = vsel %vm385, %v774, 0
    %v784 = vsel %vm385, %v775, 0
    %786 = vmatprep.subr.mxu0 0.0
    %787 = vmatpush1.msra.mxu0 %v776
    %788 = vmatprep.subr.mxu0 0.0
    %789 = vmatpush1.msra.mxu0 %v777
    %790 = vmatprep.subr.mxu0 0.0
    %791 = vmatpush1.msra.mxu0 %v778
    %792 = vmatprep.subr.mxu0 0.0
    %793 = vmatpush1.msra.mxu0 %v779
    %794 = vmatprep.subr.mxu0 0.0
    %795 = vmatpush1.msra.mxu0 0.0
    %796 = vmatprep.subr.mxu0 0.0
    %797 = vmatpush1.msra.mxu0 0.0
    %798 = vmatprep.subr.mxu0 0.0
    %799 = vmatpush1.msra.mxu0 0.0
    %800 = vmatprep.subr.mxu0 0.0
    %801 = vmatpush1.msra.mxu0 0.0
    %802 = vmatprep.subr.mxu0 0.0
    %803 = vmatpush1.msra.mxu0 0.0
    %804 = vmatprep.subr.mxu0 0.0
    %805 = vmatpush1.msra.mxu0 0.0
    %806 = vmatprep.subr.mxu0 0.0
    %807 = vmatpush1.msra.mxu0 0.0
    %808 = vmatprep.subr.mxu0 0.0
    %809 = vmatpush1.msra.mxu0 0.0
    %810 = vmatprep.subr.mxu0 0.0
    %811 = vmatpush1.msra.mxu0 0.0
    %812 = vmatprep.subr.mxu0 0.0
    %813 = vmatpush1.msra.mxu0 0.0
    %814 = vmatprep.subr.mxu0 0.0
    %815 = vmatpush1.msra.mxu0 0.0
    %816 = vmatprep.subr.mxu0 0.0
    %817 = vmatpush1.msra.mxu0 0.0
    %818 = vmatprep.subr.mxu0 0.0
    %819 = vmatpush1.msra.mxu0 0.0
    %820 = vmatprep.subr.mxu0 0.0
    %821 = vmatpush1.msra.mxu0 0.0
    %822 = vmatprep.subr.mxu0 0.0
    %823 = vmatpush1.msra.mxu0 0.0
    %824 = vmatprep.subr.mxu0 0.0
    %825 = vmatpush1.msra.mxu0 0.0
    %826 = vmatprep.subr.mxu0 0.0
    %827 = vmatpush1.msra.mxu0 0.0
    %828 = vmatprep.subr.mxu0 0.0
    %829 = vmatpush1.msra.mxu0 0.0
    %830 = vmatprep.subr.mxu0 0.0
    %831 = vmatpush1.msra.mxu0 0.0
    %832 = vmatprep.subr.mxu0 0.0
    %833 = vmatpush1.msra.mxu0 0.0
    %834 = vmatprep.subr.mxu0 0.0
    %835 = vmatpush1.msra.mxu0 0.0
    %836 = vmatprep.subr.mxu0 0.0
    %837 = vmatpush1.msra.mxu0 0.0
    %838 = vmatprep.subr.mxu0 0.0
    %839 = vmatpush1.msra.mxu0 0.0
    %840 = vmatprep.subr.mxu0 0.0
    %841 = vmatpush1.msra.mxu0 0.0
    %842 = vmatprep.subr.mxu0 0.0
    %843 = vmatpush1.msra.mxu0 0.0
    %844 = vmatprep.subr.mxu0 0.0
    %845 = vmatpush1.msra.mxu0 0.0
    %846 = vmatprep.subr.mxu0 0.0
    %847 = vmatpush1.msra.mxu0 0.0
    %848 = vmatprep.subr.mxu0 0.0
    %849 = vmatpush1.msra.mxu0 0.0
    %850 = vmatprep.mubr.f32.mxu0 0.0
    %851 = vmatmul.mubr.f32.gmra.mrb[0].mxu0 %v781
    %v852 = vpop.f32.mrb[0].mxu0
    %v853 = vadd.f32 0.0, %v852
    %v854 = vpop.f32.mrb[0].mxu0
    %855 = vmatprep.mubr.f32.mxu0 0.0
    %856 = vmatmul.mubr.f32.gmra.mrb[0].mxu0 %v784
    %v857 = vpop.f32.mrb[0].mxu0
    %v858 = vadd.f32 0.0, %v857
    %v859 = vpop.f32.mrb[0].mxu0
    %860 = vdwg.mxu0
    %v861 = vld [vmem:[%s43] sm:$0xff]
    %v862 = vmax.f32 %v861, -10.0
    %v863 = vmin.f32 %v862, 10.0
    %v864 = vadd.f32 %v853, %v863
    %v865 = vadd.f32 %v858, %v863
    %v866 = vmax.f32 %v864, -10.0
    %v867 = vmax.f32 %v865, -10.0
    %v868 = vmin.f32 %v866, 10.0
    %v869 = vmin.f32 %v867, 10.0
    %vm870 = vcmask 31744
    %v871 = vsel %vm870, %v868, -inf
    %v872 = vrot.slane %v871, 4
    %v873 = vmax.f32 %v871, %v872
    %v874 = vrot.slane %v873, 2
    %v875 = vmax.f32 %v873, %v874
    %v876 = vrot.slane %v875, 1
    %v877 = vmax.f32 %v875, %v876
    %v878 = vsel %vm870, %v869, -inf
    %v879 = vrot.slane %v878, 4
    %v880 = vmax.f32 %v878, %v879
    %v881 = vrot.slane %v880, 2
    %v882 = vmax.f32 %v880, %v881
    %v883 = vrot.slane %v882, 1
    %v884 = vmax.f32 %v882, %v883
    %v885 = vsub.f32 %v868, %v877
    %v886 = vsub.f32 %v869, %v884
    %v887 = vmul.f32 %v885, 1.442695
    %v888 = vpow.pop %v887
    %v889 = vmul.f32 %v886, 1.442695
    %v890 = vpow.pop %v889
    %v891 = vsel %vm870, %v888, 0.0
    %v892 = vrot.slane %v891, 4
    %v893 = vadd.f32 %v891, %v892
    %v894 = vrot.slane %v893, 2
    %v895 = vadd.f32 %v893, %v894
    %v896 = vrot.slane %v895, 1
    %v897 = vadd.f32 %v895, %v896
    %v898 = vsel %vm870, %v890, 0.0
    %v899 = vrot.slane %v898, 4
    %v900 = vadd.f32 %v898, %v899
    %v901 = vrot.slane %v900, 2
    %v902 = vadd.f32 %v900, %v901
    %v903 = vrot.slane %v902, 1
    %v904 = vadd.f32 %v902, %v903
    %v905 = vrcp.pop %v897
    %v906 = vrcp.pop %v904
    %v907 = vmul.f32 %v888, %v905
    %v908 = vmul.f32 %v890, %v906
    %v909 = vld [vmem:[%s47] sm:$0xf]
    %v911 = vsel %vm870, %v907, 0
    %v914 = vsel %vm870, %v908, 0
    %vm916 = vcmask 1043456
    %v918 = vsel %vm916, %v909, 0
    %920 = vmatprep.subr.mxu0 0.0
    %921 = vmatpush1.msra.mxu0 %v918
    %922 = vmatprep.subr.mxu0 0.0
    %923 = vmatpush1.msra.mxu0 0.0
    %924 = vmatprep.subr.mxu0 0.0
    %925 = vmatpush1.msra.mxu0 0.0
    %926 = vmatprep.subr.mxu0 0.0
    %927 = vmatpush1.msra.mxu0 0.0
    %928 = vmatprep.subr.mxu0 0.0
    %929 = vmatpush1.msra.mxu0 0.0
    %930 = vmatprep.subr.mxu0 0.0
    %931 = vmatpush1.msra.mxu0 0.0
    %932 = vmatprep.subr.mxu0 0.0
    %933 = vmatpush1.msra.mxu0 0.0
    %934 = vmatprep.subr.mxu0 0.0
    %935 = vmatpush1.msra.mxu0 0.0
    %936 = vmatprep.subr.mxu0 0.0
    %937 = vmatpush1.msra.mxu0 0.0
    %938 = vmatprep.subr.mxu0 0.0
    %939 = vmatpush1.msra.mxu0 0.0
    %940 = vmatprep.subr.mxu0 0.0
    %941 = vmatpush1.msra.mxu0 0.0
    %942 = vmatprep.subr.mxu0 0.0
    %943 = vmatpush1.msra.mxu0 0.0
    %944 = vmatprep.subr.mxu0 0.0
    %945 = vmatpush1.msra.mxu0 0.0
    %946 = vmatprep.subr.mxu0 0.0
    %947 = vmatpush1.msra.mxu0 0.0
    %948 = vmatprep.subr.mxu0 0.0
    %949 = vmatpush1.msra.mxu0 0.0
    %950 = vmatprep.subr.mxu0 0.0
    %951 = vmatpush1.msra.mxu0 0.0
    %952 = vmatprep.subr.mxu0 0.0
    %953 = vmatpush1.msra.mxu0 0.0
    %954 = vmatprep.subr.mxu0 0.0
    %955 = vmatpush1.msra.mxu0 0.0
    %956 = vmatprep.subr.mxu0 0.0
    %957 = vmatpush1.msra.mxu0 0.0
    %958 = vmatprep.subr.mxu0 0.0
    %959 = vmatpush1.msra.mxu0 0.0
    %960 = vmatprep.subr.mxu0 0.0
    %961 = vmatpush1.msra.mxu0 0.0
    %962 = vmatprep.subr.mxu0 0.0
    %963 = vmatpush1.msra.mxu0 0.0
    %964 = vmatprep.subr.mxu0 0.0
    %965 = vmatpush1.msra.mxu0 0.0
    %966 = vmatprep.subr.mxu0 0.0
    %967 = vmatpush1.msra.mxu0 0.0
    %968 = vmatprep.subr.mxu0 0.0
    %969 = vmatpush1.msra.mxu0 0.0
    %970 = vmatprep.subr.mxu0 0.0
    %971 = vmatpush1.msra.mxu0 0.0
    %972 = vmatprep.subr.mxu0 0.0
    %973 = vmatpush1.msra.mxu0 0.0
    %974 = vmatprep.subr.mxu0 0.0
    %975 = vmatpush1.msra.mxu0 0.0
    %976 = vmatprep.subr.mxu0 0.0
    %977 = vmatpush1.msra.mxu0 0.0
    %978 = vmatprep.subr.mxu0 0.0
    %979 = vmatpush1.msra.mxu0 0.0
    %980 = vmatprep.subr.mxu0 0.0
    %981 = vmatpush1.msra.mxu0 0.0
    %982 = vmatprep.subr.mxu0 0.0
    %983 = vmatpush1.msra.mxu0 0.0
    %984 = vmatprep.mubr.f32.mxu0 0.0
    %985 = vmatmul.mubr.f32.gmra.mrb[0].mxu0 %v911
    %v986 = vpop.f32.mrb[0].mxu0
    %v987 = vadd.f32 0.0, %v986
    %v988 = vpop.f32.mrb[0].mxu0
    %989 = vmatprep.mubr.f32.mxu0 0.0
    %990 = vmatmul.mubr.f32.gmra.mrb[0].mxu0 %v914
    %v991 = vpop.f32.mrb[0].mxu0
    %v992 = vadd.f32 0.0, %v991
    %v993 = vpop.f32.mrb[0].mxu0
    %994 = vdwg.mxu0
    %v995 = vmul.f32 %v987, %v733
    %v996 = vmul.f32 %v992, %v738
    %v997 = vsel %vm385, %v995, 0.0
    %v998 = vrot.slane %v997, 4
    %v999 = vadd.f32 %v997, %v998
    %v1000 = vrot.slane %v999, 2
    %v1001 = vadd.f32 %v999, %v1000
    %v1002 = vrot.slane %v1001, 1
    %v1003 = vadd.f32 %v1001, %v1002
    %v1004 = vsel %vm385, %v996, 0.0
    %v1005 = vrot.slane %v1004, 4
    %v1006 = vadd.f32 %v1004, %v1005
    %v1007 = vrot.slane %v1006, 2
    %v1008 = vadd.f32 %v1006, %v1007
    %v1009 = vrot.slane %v1008, 1
    %v1010 = vadd.f32 %v1008, %v1009
    %v1011 = vld [vmem:[%s39] sm:$0xff]
    %v1012 = vld [vmem:[%s39 + $0x8] sm:$0xff]
    %v1013 = vld [vmem:[%s39 + $0x10] sm:$0xff]
    %v1014 = vld [vmem:[%s39 + $0x18] sm:$0xff]
    %v1015 = vld [vmem:[%s41] sm:$0x1]
    %v1017 = vlaneseq
    %v1018 = vshrl.u32 %v1017, 7
    %v1019 = vsub.s32 0, %v1018
    %v1020 = vrot.slane %v1015, %v1019
    %v1024 = vsel %vm490, %v1010, %v1003
    %v1025 = vsel %vm385, %v1024, 0
    %1027 = vmatprep.subr.mxu0 0.0
    %1028 = vmatpush1.msra.mxu0 %v1011
    %1029 = vmatprep.subr.mxu0 0.0
    %1030 = vmatpush1.msra.mxu0 %v1012
    %1031 = vmatprep.subr.mxu0 0.0
    %1032 = vmatpush1.msra.mxu0 %v1013
    %1033 = vmatprep.subr.mxu0 0.0
    %1034 = vmatpush1.msra.mxu0 %v1014
    %1035 = vmatprep.subr.mxu0 0.0
    %1036 = vmatpush1.msra.mxu0 0.0
    %1037 = vmatprep.subr.mxu0 0.0
    %1038 = vmatpush1.msra.mxu0 0.0
    %1039 = vmatprep.subr.mxu0 0.0
    %1040 = vmatpush1.msra.mxu0 0.0
    %1041 = vmatprep.subr.mxu0 0.0
    %1042 = vmatpush1.msra.mxu0 0.0
    %1043 = vmatprep.subr.mxu0 0.0
    %1044 = vmatpush1.msra.mxu0 0.0
    %1045 = vmatprep.subr.mxu0 0.0
    %1046 = vmatpush1.msra.mxu0 0.0
    %1047 = vmatprep.subr.mxu0 0.0
    %1048 = vmatpush1.msra.mxu0 0.0
    %1049 = vmatprep.subr.mxu0 0.0
    %1050 = vmatpush1.msra.mxu0 0.0
    %1051 = vmatprep.subr.mxu0 0.0
    %1052 = vmatpush1.msra.mxu0 0.0
    %1053 = vmatprep.subr.mxu0 0.0
    %1054 = vmatpush1.msra.mxu0 0.0
    %1055 = vmatprep.subr.mxu0 0.0
    %1056 = vmatpush1.msra.mxu0 0.0
    %1057 = vmatprep.subr.mxu0 0.0
    %1058 = vmatpush1.msra.mxu0 0.0
    %1059 = vmatprep.subr.mxu0 0.0
    %1060 = vmatpush1.msra.mxu0 0.0
    %1061 = vmatprep.subr.mxu0 0.0
    %1062 = vmatpush1.msra.mxu0 0.0
    %1063 = vmatprep.subr.mxu0 0.0
    %1064 = vmatpush1.msra.mxu0 0.0
    %1065 = vmatprep.subr.mxu0 0.0
    %1066 = vmatpush1.msra.mxu0 0.0
    %1067 = vmatprep.subr.mxu0 0.0
    %1068 = vmatpush1.msra.mxu0 0.0
    %1069 = vmatprep.subr.mxu0 0.0
    %1070 = vmatpush1.msra.mxu0 0.0
    %1071 = vmatprep.subr.mxu0 0.0
    %1072 = vmatpush1.msra.mxu0 0.0
    %1073 = vmatprep.subr.mxu0 0.0
    %1074 = vmatpush1.msra.mxu0 0.0
    %1075 = vmatprep.subr.mxu0 0.0
    %1076 = vmatpush1.msra.mxu0 0.0
    %1077 = vmatprep.subr.mxu0 0.0
    %1078 = vmatpush1.msra.mxu0 0.0
    %1079 = vmatprep.subr.mxu0 0.0
    %1080 = vmatpush1.msra.mxu0 0.0
    %1081 = vmatprep.subr.mxu0 0.0
    %1082 = vmatpush1.msra.mxu0 0.0
    %1083 = vmatprep.subr.mxu0 0.0
    %1084 = vmatpush1.msra.mxu0 0.0
    %1085 = vmatprep.subr.mxu0 0.0
    %1086 = vmatpush1.msra.mxu0 0.0
    %1087 = vmatprep.subr.mxu0 0.0
    %1088 = vmatpush1.msra.mxu0 0.0
    %1089 = vmatprep.subr.mxu0 0.0
    %1090 = vmatpush1.msra.mxu0 0.0
    %1091 = vmatprep.mubr.f32.mxu0 0.0
    %1092 = vmatmul.mubr.f32.gmra.mrb[0].mxu0 %v1025
    %v1093 = vpop.f32.mrb[0].mxu0
    %v1094 = vadd.f32 %v1020, %v1093
    %v1095 = vpop.f32.mrb[0].mxu0
    %1096 = vdwg.mxu0
    %v1099 = vrot.slane %v194, 4
    %v1100 = vrot.slane %v195, 3
    %v1101 = vsel %vm490, %v1100, %v1099
    %v1103 = vadd.f32 %v1094, %v1101
    %v1104 = vld [vmem:[%s49] sm:$0x1]
    %v1105 = vld [vmem:[%s51] sm:$0x1]
    %vm1106 = vcmask 254976
    %v1107 = vsel %vm1106, %v1103, 0.0
    %1108 = vadd.xlane.f32.xlu0 %v1107
    %v1109 = vpop.xlane.xlu0 %1108
    %v1110 = vmul.f32 %v1109, %v392
    %v1111 = vsub.f32 %v1103, %v1110
    %v1112 = vmul.f32 %v1111, %v1111
    %v1113 = vsel %vm1106, %v1112, 0.0
    %1114 = vadd.xlane.f32.xlu0 %v1113
    %v1115 = vpop.xlane.xlu0 %1114
    %v1116 = vmul.f32 %v1115, %v392
    %v1117 = vadd.f32 %v1116, 1e-05
    %v1118 = vrsqrt.pop %v1117
    %v1119 = vmul.f32 %v1111, %v1118
    %v1121 = vlaneseq
    %v1122 = vshrl.u32 %v1121, 7
    %v1123 = vsub.s32 0, %v1122
    %v1124 = vrot.slane %v1104, %v1123
    %v1126 = vmul.f32 %v1119, %v1124
    %v1128 = vlaneseq
    %v1129 = vshrl.u32 %v1128, 7
    %v1130 = vsub.s32 0, %v1129
    %v1131 = vrot.slane %v1105, %v1130
    %v1133 = vadd.f32 %v1126, %v1131
    %v1134 = vld [vmem:[%s53] sm:$0xff]
    %v1135 = vld [vmem:[%s53 + $0x8] sm:$0xff]
    %v1136 = vld [vmem:[%s53 + $0x10] sm:$0xff]
    %v1137 = vld [vmem:[%s53 + $0x18] sm:$0xff]
    %v1138 = vld [vmem:[%s55] sm:$0x1]
    %v1140 = vlaneseq
    %v1141 = vshrl.u32 %v1140, 7
    %v1142 = vsub.s32 0, %v1141
    %v1143 = vrot.slane %v1138, %v1142
    %v1146 = vsel %vm385, %v1133, 0
    %1148 = vmatprep.subr.mxu0 0.0
    %1149 = vmatpush1.msra.mxu0 %v1134
    %1150 = vmatprep.subr.mxu0 0.0
    %1151 = vmatpush1.msra.mxu0 %v1135
    %1152 = vmatprep.subr.mxu0 0.0
    %1153 = vmatpush1.msra.mxu0 %v1136
    %1154 = vmatprep.subr.mxu0 0.0
    %1155 = vmatpush1.msra.mxu0 %v1137
    %1156 = vmatprep.subr.mxu0 0.0
    %1157 = vmatpush1.msra.mxu0 0.0
    %1158 = vmatprep.subr.mxu0 0.0
    %1159 = vmatpush1.msra.mxu0 0.0
    %1160 = vmatprep.subr.mxu0 0.0
    %1161 = vmatpush1.msra.mxu0 0.0
    %1162 = vmatprep.subr.mxu0 0.0
    %1163 = vmatpush1.msra.mxu0 0.0
    %1164 = vmatprep.subr.mxu0 0.0
    %1165 = vmatpush1.msra.mxu0 0.0
    %1166 = vmatprep.subr.mxu0 0.0
    %1167 = vmatpush1.msra.mxu0 0.0
    %1168 = vmatprep.subr.mxu0 0.0
    %1169 = vmatpush1.msra.mxu0 0.0
    %1170 = vmatprep.subr.mxu0 0.0
    %1171 = vmatpush1.msra.mxu0 0.0
    %1172 = vmatprep.subr.mxu0 0.0
    %1173 = vmatpush1.msra.mxu0 0.0
    %1174 = vmatprep.subr.mxu0 0.0
    %1175 = vmatpush1.msra.mxu0 0.0
    %1176 = vmatprep.subr.mxu0 0.0
    %1177 = vmatpush1.msra.mxu0 0.0
    %1178 = vmatprep.subr.mxu0 0.0
    %1179 = vmatpush1.msra.mxu0 0.0
    %1180 = vmatprep.subr.mxu0 0.0
    %1181 = vmatpush1.msra.mxu0 0.0
    %1182 = vmatprep.subr.mxu0 0.0
    %1183 = vmatpush1.msra.mxu0 0.0
    %1184 = vmatprep.subr.mxu0 0.0
    %1185 = vmatpush1.msra.mxu0 0.0
    %1186 = vmatprep.subr.mxu0 0.0
    %1187 = vmatpush1.msra.mxu0 0.0
    %1188 = vmatprep.subr.mxu0 0.0
    %1189 = vmatpush1.msra.mxu0 0.0
    %1190 = vmatprep.subr.mxu0 0.0
    %1191 = vmatpush1.msra.mxu0 0.0
    %1192 = vmatprep.subr.mxu0 0.0
    %1193 = vmatpush1.msra.mxu0 0.0
    %1194 = vmatprep.subr.mxu0 0.0
    %1195 = vmatpush1.msra.mxu0 0.0
    %1196 = vmatprep.subr.mxu0 0.0
    %1197 = vmatpush1.msra.mxu0 0.0
    %1198 = vmatprep.subr.mxu0 0.0
    %1199 = vmatpush1.msra.mxu0 0.0
    %1200 = vmatprep.subr.mxu0 0.0
    %1201 = vmatpush1.msra.mxu0 0.0
    %1202 = vmatprep.subr.mxu0 0.0
    %1203 = vmatpush1.msra.mxu0 0.0
    %1204 = vmatprep.subr.mxu0 0.0
    %1205 = vmatpush1.msra.mxu0 0.0
    %1206 = vmatprep.subr.mxu0 0.0
    %1207 = vmatpush1.msra.mxu0 0.0
    %1208 = vmatprep.subr.mxu0 0.0
    %1209 = vmatpush1.msra.mxu0 0.0
    %1210 = vmatprep.subr.mxu0 0.0
    %1211 = vmatpush1.msra.mxu0 0.0
    %1212 = vmatprep.mubr.f32.mxu0 0.0
    %1213 = vmatmul.mubr.f32.gmra.mrb[0].mxu0 %v1146
    %v1214 = vpop.f32.mrb[0].mxu0
    %v1215 = vadd.f32 %v1143, %v1214
    %v1216 = vpop.f32.mrb[0].mxu0
    %1217 = vdwg.mxu0
    %v1218 = vmul.f32 %v1215, 0.5
    %v1219 = vmul.f32 %v1215, 0.70710677
    %vm1220 = vcmp.ge.f32.partialorder %v1219, 0.0
    %v1221 = vsel %vm1220, 1.0, -1.0
    %v1222 = vand.u32 2147483647, %v1219
    %v1223 = vmul.f32 %v1222, 0.3275911
    %v1224 = vadd.f32 %v1223, 1.0
    %v1225 = vrcp.pop %v1224
    %v1226 = vmul.f32 1.0, %v1225
    %v1227 = vmul.f32 %v1226, 1.0614054
    %v1228 = vsub.f32 %v1227, 1.4531521
    %v1229 = vmul.f32 %v1228, %v1226
    %v1230 = vadd.f32 %v1229, 1.4214138
    %v1231 = vmul.f32 %v1230, %v1226
    %v1232 = vsub.f32 %v1231, 0.28449672
    %v1233 = vmul.f32 %v1232, %v1226
    %v1234 = vadd.f32 %v1233, 0.2548296
    %v1235 = vmul.f32 %v1234, %v1226
    %v1236 = vsub.f32 0.0, %v1222
    %v1237 = vmul.f32 %v1236, %v1222
    %v1238 = vmul.f32 %v1237, 1.442695
    %v1239 = vpow.pop %v1238
    %v1240 = vmul.f32 %v1235, %v1239
    %v1241 = vsub.f32 1.0, %v1240
    %v1242 = vmul.f32 %v1221, %v1241
    %v1243 = vadd.f32 %v1242, 1.0
    %v1244 = vmul.f32 %v1218, %v1243
    %v1245 = vld [vmem:[%s57] sm:$0xff]
    %v1246 = vld [vmem:[%s57 + $0x8] sm:$0xff]
    %v1247 = vld [vmem:[%s57 + $0x10] sm:$0xff]
    %v1248 = vld [vmem:[%s57 + $0x18] sm:$0xff]
    %v1249 = vld [vmem:[%s57 + $0x20] sm:$0xff]
    %v1250 = vld [vmem:[%s57 + $0x28] sm:$0xff]
    %v1251 = vld [vmem:[%s57 + $0x30] sm:$0xff]
    %v1252 = vld [vmem:[%s57 + $0x38] sm:$0xff]
    %v1253 = vld [vmem:[%s57 + $0x40] sm:$0xff]
    %v1254 = vld [vmem:[%s57 + $0x48] sm:$0xff]
    %v1255 = vld [vmem:[%s57 + $0x50] sm:$0xff]
    %v1256 = vld [vmem:[%s57 + $0x58] sm:$0xff]
    %v1257 = vld [vmem:[%s57 + $0x60] sm:$0xff]
    %v1258 = vld [vmem:[%s57 + $0x68] sm:$0xff]
    %v1259 = vld [vmem:[%s57 + $0x70] sm:$0xff]
    %v1260 = vld [vmem:[%s57 + $0x78] sm:$0xff]
    %v1261 = vld [vmem:[%s59] sm:$0x1]
    %v1263 = vlaneseq
    %v1264 = vshrl.u32 %v1263, 7
    %v1265 = vsub.s32 0, %v1264
    %v1266 = vrot.slane %v1261, %v1265
    %1268 = vmatprep.subr.mxu0 0.0
    %1269 = vmatpush1.msra.mxu0 %v1245
    %1270 = vmatprep.subr.mxu0 0.0
    %1271 = vmatpush1.msra.mxu0 %v1246
    %1272 = vmatprep.subr.mxu0 0.0
    %1273 = vmatpush1.msra.mxu0 %v1247
    %1274 = vmatprep.subr.mxu0 0.0
    %1275 = vmatpush1.msra.mxu0 %v1248
    %1276 = vmatprep.subr.mxu0 0.0
    %1277 = vmatpush1.msra.mxu0 %v1249
    %1278 = vmatprep.subr.mxu0 0.0
    %1279 = vmatpush1.msra.mxu0 %v1250
    %1280 = vmatprep.subr.mxu0 0.0
    %1281 = vmatpush1.msra.mxu0 %v1251
    %1282 = vmatprep.subr.mxu0 0.0
    %1283 = vmatpush1.msra.mxu0 %v1252
    %1284 = vmatprep.subr.mxu0 0.0
    %1285 = vmatpush1.msra.mxu0 %v1253
    %1286 = vmatprep.subr.mxu0 0.0
    %1287 = vmatpush1.msra.mxu0 %v1254
    %1288 = vmatprep.subr.mxu0 0.0
    %1289 = vmatpush1.msra.mxu0 %v1255
    %1290 = vmatprep.subr.mxu0 0.0
    %1291 = vmatpush1.msra.mxu0 %v1256
    %1292 = vmatprep.subr.mxu0 0.0
    %1293 = vmatpush1.msra.mxu0 %v1257
    %1294 = vmatprep.subr.mxu0 0.0
    %1295 = vmatpush1.msra.mxu0 %v1258
    %1296 = vmatprep.subr.mxu0 0.0
    %1297 = vmatpush1.msra.mxu0 %v1259
    %1298 = vmatprep.subr.mxu0 0.0
    %1299 = vmatpush1.msra.mxu0 %v1260
    %1300 = vmatprep.subr.mxu0 0.0
    %1301 = vmatpush1.msra.mxu0 0.0
    %1302 = vmatprep.subr.mxu0 0.0
    %1303 = vmatpush1.msra.mxu0 0.0
    %1304 = vmatprep.subr.mxu0 0.0
    %1305 = vmatpush1.msra.mxu0 0.0
    %1306 = vmatprep.subr.mxu0 0.0
    %1307 = vmatpush1.msra.mxu0 0.0
    %1308 = vmatprep.subr.mxu0 0.0
    %1309 = vmatpush1.msra.mxu0 0.0
    %1310 = vmatprep.subr.mxu0 0.0
    %1311 = vmatpush1.msra.mxu0 0.0
    %1312 = vmatprep.subr.mxu0 0.0
    %1313 = vmatpush1.msra.mxu0 0.0
    %1314 = vmatprep.subr.mxu0 0.0
    %1315 = vmatpush1.msra.mxu0 0.0
    %1316 = vmatprep.subr.mxu0 0.0
    %1317 = vmatpush1.msra.mxu0 0.0
    %1318 = vmatprep.subr.mxu0 0.0
    %1319 = vmatpush1.msra.mxu0 0.0
    %1320 = vmatprep.subr.mxu0 0.0
    %1321 = vmatpush1.msra.mxu0 0.0
    %1322 = vmatprep.subr.mxu0 0.0
    %1323 = vmatpush1.msra.mxu0 0.0
    %1324 = vmatprep.subr.mxu0 0.0
    %1325 = vmatpush1.msra.mxu0 0.0
    %1326 = vmatprep.subr.mxu0 0.0
    %1327 = vmatpush1.msra.mxu0 0.0
    %1328 = vmatprep.subr.mxu0 0.0
    %1329 = vmatpush1.msra.mxu0 0.0
    %1330 = vmatprep.subr.mxu0 0.0
    %1331 = vmatpush1.msra.mxu0 0.0
    %1332 = vmatprep.mubr.f32.mxu0 0.0
    %1333 = vmatmul.mubr.f32.gmra.mrb[0].mxu0 %v1244
    %v1334 = vpop.f32.mrb[0].mxu0
    %v1335 = vadd.f32 %v1266, %v1334
    %v1336 = vpop.f32.mrb[0].mxu0
    %1337 = vdwg.mxu0
    %v1338 = vadd.f32 %v1335, %v1103
    %v1339 = vld [vmem:[%s61] sm:$0x1]
    %v1340 = vld [vmem:[%s63] sm:$0x1]
    %v1341 = vsel %vm1106, %v1338, 0.0
    %1342 = vadd.xlane.f32.xlu0 %v1341
    %v1343 = vpop.xlane.xlu0 %1342
    %v1344 = vmul.f32 %v1343, %v392
    %v1345 = vsub.f32 %v1338, %v1344
    %v1346 = vmul.f32 %v1345, %v1345
    %v1347 = vsel %vm1106, %v1346, 0.0
    %1348 = vadd.xlane.f32.xlu0 %v1347
    %v1349 = vpop.xlane.xlu0 %1348
    %v1350 = vmul.f32 %v1349, %v392
    %v1351 = vadd.f32 %v1350, 1e-05
    %v1352 = vrsqrt.pop %v1351
    %v1353 = vmul.f32 %v1345, %v1352
    %v1355 = vlaneseq
    %v1356 = vshrl.u32 %v1355, 7
    %v1357 = vsub.s32 0, %v1356
    %v1358 = vrot.slane %v1339, %v1357
    %v1360 = vmul.f32 %v1353, %v1358
    %v1362 = vlaneseq
    %v1363 = vshrl.u32 %v1362, 7
    %v1364 = vsub.s32 0, %v1363
    %v1365 = vrot.slane %v1340, %v1364
    %v1367 = vadd.f32 %v1360, %v1365
    %v1368 = vld [vmem:[%s65] sm:$0xff]
    %v1369 = vld [vmem:[%s65 + $0x8] sm:$0xff]
    %v1370 = vld [vmem:[%s65 + $0x10] sm:$0xff]
    %v1371 = vld [vmem:[%s65 + $0x18] sm:$0xff]
    %v1372 = vld [vmem:[%s67] sm:$0x1]
    %v1374 = vlaneseq
    %v1375 = vshrl.u32 %v1374, 7
    %v1376 = vsub.s32 0, %v1375
    %v1377 = vrot.slane %v1372, %v1376
    %v1380 = vsel %vm385, %v1367, 0
    %1382 = vmatprep.subr.mxu0 0.0
    %1383 = vmatpush1.msra.mxu0 %v1368
    %1384 = vmatprep.subr.mxu0 0.0
    %1385 = vmatpush1.msra.mxu0 %v1369
    %1386 = vmatprep.subr.mxu0 0.0
    %1387 = vmatpush1.msra.mxu0 %v1370
    %1388 = vmatprep.subr.mxu0 0.0
    %1389 = vmatpush1.msra.mxu0 %v1371
    %1390 = vmatprep.subr.mxu0 0.0
    %1391 = vmatpush1.msra.mxu0 0.0
    %1392 = vmatprep.subr.mxu0 0.0
    %1393 = vmatpush1.msra.mxu0 0.0
    %1394 = vmatprep.subr.mxu0 0.0
    %1395 = vmatpush1.msra.mxu0 0.0
    %1396 = vmatprep.subr.mxu0 0.0
    %1397 = vmatpush1.msra.mxu0 0.0
    %1398 = vmatprep.subr.mxu0 0.0
    %1399 = vmatpush1.msra.mxu0 0.0
    %1400 = vmatprep.subr.mxu0 0.0
    %1401 = vmatpush1.msra.mxu0 0.0
    %1402 = vmatprep.subr.mxu0 0.0
    %1403 = vmatpush1.msra.mxu0 0.0
    %1404 = vmatprep.subr.mxu0 0.0
    %1405 = vmatpush1.msra.mxu0 0.0
    %1406 = vmatprep.subr.mxu0 0.0
    %1407 = vmatpush1.msra.mxu0 0.0
    %1408 = vmatprep.subr.mxu0 0.0
    %1409 = vmatpush1.msra.mxu0 0.0
    %1410 = vmatprep.subr.mxu0 0.0
    %1411 = vmatpush1.msra.mxu0 0.0
    %1412 = vmatprep.subr.mxu0 0.0
    %1413 = vmatpush1.msra.mxu0 0.0
    %1414 = vmatprep.subr.mxu0 0.0
    %1415 = vmatpush1.msra.mxu0 0.0
    %1416 = vmatprep.subr.mxu0 0.0
    %1417 = vmatpush1.msra.mxu0 0.0
    %1418 = vmatprep.subr.mxu0 0.0
    %1419 = vmatpush1.msra.mxu0 0.0
    %1420 = vmatprep.subr.mxu0 0.0
    %1421 = vmatpush1.msra.mxu0 0.0
    %1422 = vmatprep.subr.mxu0 0.0
    %1423 = vmatpush1.msra.mxu0 0.0
    %1424 = vmatprep.subr.mxu0 0.0
    %1425 = vmatpush1.msra.mxu0 0.0
    %1426 = vmatprep.subr.mxu0 0.0
    %1427 = vmatpush1.msra.mxu0 0.0
    %1428 = vmatprep.subr.mxu0 0.0
    %1429 = vmatpush1.msra.mxu0 0.0
    %1430 = vmatprep.subr.mxu0 0.0
    %1431 = vmatpush1.msra.mxu0 0.0
    %1432 = vmatprep.subr.mxu0 0.0
    %1433 = vmatpush1.msra.mxu0 0.0
    %1434 = vmatprep.subr.mxu0 0.0
    %1435 = vmatpush1.msra.mxu0 0.0
    %1436 = vmatprep.subr.mxu0 0.0
    %1437 = vmatpush1.msra.mxu0 0.0
    %1438 = vmatprep.subr.mxu0 0.0
    %1439 = vmatpush1.msra.mxu0 0.0
    %1440 = vmatprep.subr.mxu0 0.0
    %1441 = vmatpush1.msra.mxu0 0.0
    %1442 = vmatprep.subr.mxu0 0.0
    %1443 = vmatpush1.msra.mxu0 0.0
    %1444 = vmatprep.subr.mxu0 0.0
    %1445 = vmatpush1.msra.mxu0 0.0
    %1446 = vmatprep.mubr.f32.mxu0 0.0
    %1447 = vmatmul.mubr.f32.gmra.mrb[0].mxu0 %v1380
    %v1448 = vpop.f32.mrb[0].mxu0
    %v1449 = vadd.f32 %v1377, %v1448
    %v1450 = vpop.f32.mrb[0].mxu0
    %1451 = vdwg.mxu0
    %v1452 = vmax.f32 %v1449, 0.0
    %v1453 = vld [vmem:[%s69] sm:$0xff]
    %v1454 = vld [vmem:[%s69 + $0x8] sm:$0xff]
    %v1455 = vld [vmem:[%s69 + $0x10] sm:$0xff]
    %v1456 = vld [vmem:[%s69 + $0x18] sm:$0xff]
    %v1457 = vld [vmem:[%s71] sm:$0x1]
    %v1459 = vlaneseq
    %v1460 = vshrl.u32 %v1459, 7
    %v1461 = vsub.s32 0, %v1460
    %v1462 = vrot.slane %v1457, %v1461
    %v1465 = vsel %vm385, %v1452, 0
    %1467 = vmatprep.subr.mxu0 0.0
    %1468 = vmatpush1.msra.mxu0 %v1453
    %1469 = vmatprep.subr.mxu0 0.0
    %1470 = vmatpush1.msra.mxu0 %v1454
    %1471 = vmatprep.subr.mxu0 0.0
    %1472 = vmatpush1.msra.mxu0 %v1455
    %1473 = vmatprep.subr.mxu0 0.0
    %1474 = vmatpush1.msra.mxu0 %v1456
    %1475 = vmatprep.subr.mxu0 0.0
    %1476 = vmatpush1.msra.mxu0 0.0
    %1477 = vmatprep.subr.mxu0 0.0
    %1478 = vmatpush1.msra.mxu0 0.0
    %1479 = vmatprep.subr.mxu0 0.0
    %1480 = vmatpush1.msra.mxu0 0.0
    %1481 = vmatprep.subr.mxu0 0.0
    %1482 = vmatpush1.msra.mxu0 0.0
    %1483 = vmatprep.subr.mxu0 0.0
    %1484 = vmatpush1.msra.mxu0 0.0
    %1485 = vmatprep.subr.mxu0 0.0
    %1486 = vmatpush1.msra.mxu0 0.0
    %1487 = vmatprep.subr.mxu0 0.0
    %1488 = vmatpush1.msra.mxu0 0.0
    %1489 = vmatprep.subr.mxu0 0.0
    %1490 = vmatpush1.msra.mxu0 0.0
    %1491 = vmatprep.subr.mxu0 0.0
    %1492 = vmatpush1.msra.mxu0 0.0
    %1493 = vmatprep.subr.mxu0 0.0
    %1494 = vmatpush1.msra.mxu0 0.0
    %1495 = vmatprep.subr.mxu0 0.0
    %1496 = vmatpush1.msra.mxu0 0.0
    %1497 = vmatprep.subr.mxu0 0.0
    %1498 = vmatpush1.msra.mxu0 0.0
    %1499 = vmatprep.subr.mxu0 0.0
    %1500 = vmatpush1.msra.mxu0 0.0
    %1501 = vmatprep.subr.mxu0 0.0
    %1502 = vmatpush1.msra.mxu0 0.0
    %1503 = vmatprep.subr.mxu0 0.0
    %1504 = vmatpush1.msra.mxu0 0.0
    %1505 = vmatprep.subr.mxu0 0.0
    %1506 = vmatpush1.msra.mxu0 0.0
    %1507 = vmatprep.subr.mxu0 0.0
    %1508 = vmatpush1.msra.mxu0 0.0
    %1509 = vmatprep.subr.mxu0 0.0
    %1510 = vmatpush1.msra.mxu0 0.0
    %1511 = vmatprep.subr.mxu0 0.0
    %1512 = vmatpush1.msra.mxu0 0.0
    %1513 = vmatprep.subr.mxu0 0.0
    %1514 = vmatpush1.msra.mxu0 0.0
    %1515 = vmatprep.subr.mxu0 0.0
    %1516 = vmatpush1.msra.mxu0 0.0
    %1517 = vmatprep.subr.mxu0 0.0
    %1518 = vmatpush1.msra.mxu0 0.0
    %1519 = vmatprep.subr.mxu0 0.0
    %1520 = vmatpush1.msra.mxu0 0.0
    %1521 = vmatprep.subr.mxu0 0.0
    %1522 = vmatpush1.msra.mxu0 0.0
    %1523 = vmatprep.subr.mxu0 0.0
    %1524 = vmatpush1.msra.mxu0 0.0
    %1525 = vmatprep.subr.mxu0 0.0
    %1526 = vmatpush1.msra.mxu0 0.0
    %1527 = vmatprep.subr.mxu0 0.0
    %1528 = vmatpush1.msra.mxu0 0.0
    %1529 = vmatprep.subr.mxu0 0.0
    %1530 = vmatpush1.msra.mxu0 0.0
    %1531 = vmatprep.mubr.f32.mxu0 0.0
    %1532 = vmatmul.mubr.f32.gmra.mrb[0].mxu0 %v1465
    %v1533 = vpop.f32.mrb[0].mxu0
    %v1534 = vadd.f32 %v1462, %v1533
    %v1535 = vpop.f32.mrb[0].mxu0
    %1536 = vdwg.mxu0
    %v1537 = vmax.f32 %v1534, 0.0
    %v1538 = vld [vmem:[%s73] sm:$0xff]
    %v1539 = vld [vmem:[%s73 + $0x8] sm:$0xff]
    %v1540 = vld [vmem:[%s75] sm:$0x1]
    %v1542 = vlaneseq
    %v1543 = vshrl.u32 %v1542, 7
    %v1544 = vsub.s32 0, %v1543
    %v1545 = vrot.slane %v1540, %v1544
    %v1548 = vsel %vm247, %v1537, 0
    %1550 = vmatprep.subr.mxu0 0.0
    %1551 = vmatpush1.msra.mxu0 %v1538
    %1552 = vmatprep.subr.mxu0 0.0
    %1553 = vmatpush1.msra.mxu0 %v1539
    %1554 = vmatprep.subr.mxu0 0.0
    %1555 = vmatpush1.msra.mxu0 0.0
    %1556 = vmatprep.subr.mxu0 0.0
    %1557 = vmatpush1.msra.mxu0 0.0
    %1558 = vmatprep.subr.mxu0 0.0
    %1559 = vmatpush1.msra.mxu0 0.0
    %1560 = vmatprep.subr.mxu0 0.0
    %1561 = vmatpush1.msra.mxu0 0.0
    %1562 = vmatprep.subr.mxu0 0.0
    %1563 = vmatpush1.msra.mxu0 0.0
    %1564 = vmatprep.subr.mxu0 0.0
    %1565 = vmatpush1.msra.mxu0 0.0
    %1566 = vmatprep.subr.mxu0 0.0
    %1567 = vmatpush1.msra.mxu0 0.0
    %1568 = vmatprep.subr.mxu0 0.0
    %1569 = vmatpush1.msra.mxu0 0.0
    %1570 = vmatprep.subr.mxu0 0.0
    %1571 = vmatpush1.msra.mxu0 0.0
    %1572 = vmatprep.subr.mxu0 0.0
    %1573 = vmatpush1.msra.mxu0 0.0
    %1574 = vmatprep.subr.mxu0 0.0
    %1575 = vmatpush1.msra.mxu0 0.0
    %1576 = vmatprep.subr.mxu0 0.0
    %1577 = vmatpush1.msra.mxu0 0.0
    %1578 = vmatprep.subr.mxu0 0.0
    %1579 = vmatpush1.msra.mxu0 0.0
    %1580 = vmatprep.subr.mxu0 0.0
    %1581 = vmatpush1.msra.mxu0 0.0
    %1582 = vmatprep.subr.mxu0 0.0
    %1583 = vmatpush1.msra.mxu0 0.0
    %1584 = vmatprep.subr.mxu0 0.0
    %1585 = vmatpush1.msra.mxu0 0.0
    %1586 = vmatprep.subr.mxu0 0.0
    %1587 = vmatpush1.msra.mxu0 0.0
    %1588 = vmatprep.subr.mxu0 0.0
    %1589 = vmatpush1.msra.mxu0 0.0
    %1590 = vmatprep.subr.mxu0 0.0
    %1591 = vmatpush1.msra.mxu0 0.0
    %1592 = vmatprep.subr.mxu0 0.0
    %1593 = vmatpush1.msra.mxu0 0.0
    %1594 = vmatprep.subr.mxu0 0.0
    %1595 = vmatpush1.msra.mxu0 0.0
    %1596 = vmatprep.subr.mxu0 0.0
    %1597 = vmatpush1.msra.mxu0 0.0
    %1598 = vmatprep.subr.mxu0 0.0
    %1599 = vmatpush1.msra.mxu0 0.0
    %1600 = vmatprep.subr.mxu0 0.0
    %1601 = vmatpush1.msra.mxu0 0.0
    %1602 = vmatprep.subr.mxu0 0.0
    %1603 = vmatpush1.msra.mxu0 0.0
    %1604 = vmatprep.subr.mxu0 0.0
    %1605 = vmatpush1.msra.mxu0 0.0
    %1606 = vmatprep.subr.mxu0 0.0
    %1607 = vmatpush1.msra.mxu0 0.0
    %1608 = vmatprep.subr.mxu0 0.0
    %1609 = vmatpush1.msra.mxu0 0.0
    %1610 = vmatprep.subr.mxu0 0.0
    %1611 = vmatpush1.msra.mxu0 0.0
    %1612 = vmatprep.subr.mxu0 0.0
    %1613 = vmatpush1.msra.mxu0 0.0
    %1614 = vmatprep.mubr.f32.mxu0 0.0
    %1615 = vmatmul.mubr.f32.gmra.mrb[0].mxu0 %v1548
    %v1616 = vpop.f32.mrb[0].mxu0
    %v1617 = vadd.f32 %v1545, %v1616
    %v1618 = vpop.f32.mrb[0].mxu0
    %1619 = vdwg.mxu0
    %1620 = vst [vmem:[#allocation8] sm:$0x3] %v1617
    // Predicated region
    $region166: #{tpu_custom_call.1} parent=1 // pred_check
      _
    $region167: #{tpu_custom_call.1} parent=1 // pred_check_branch
      %1622 = sbr.rel (0) target = $region169
    $region168: #{tpu_custom_call.1} parent=1 // pred_region
      %s1624 = ssub.s32 32, 32
      %1625 = vsyncadd [#allocation4], %s1624
      %s1627 = sshll.u32 [#allocation8], 4
      %s1628 = int_to_ptr.vmem [resolvable:$true] %s1627
      %1630 = dma.vmem_to_hbm [thread:$0]  %s1628, 32, %s77, [#allocation4]
    $region169: #{tpu_custom_call.1} parent=1 // pred_fallthru
      _
    // Predicated region
    $region170: #{tpu_custom_call.1} parent=1 // pred_check
      _
    $region171: #{tpu_custom_call.1} parent=1 // pred_check_branch
      %1632 = sbr.rel (0) target = $region173
    $region172: #{tpu_custom_call.1} parent=1 // pred_region
      %1633 = dma.done [#allocation4], 32
    $region173: #{tpu_custom_call.1} parent=1 // pred_fallthru
      _
    %1634 = vsyncpa [#allocation3], 1
    %1635 = vsyncpa [#allocation6], 1
    %1636 = vsyncpa [#allocation4], 1

</llo_original>
